<compile_context>
chip_gen: v5e
topology: v5e:2x2
jax: 0.10.0
libtpu: 0.0.40
codegen_flags: <defaults>
</compile_context>

<pallas_src>
import functools
import math

import jax
import jax.numpy as jnp
from jax.experimental import pallas as pl
from jax.experimental.pallas import tpu as pltpu


def _pick_tile(dim, candidates):
    """Largest preferred tile that evenly divides `dim`, else the full dim."""
    for c in candidates:
        if c <= dim and dim % c == 0:
            return c
    return dim


# ---------------- tiled linear (bias + optional activation) ----------------

def _matmul_kernel(x_ref, w_ref, b_ref, o_ref, acc_ref, *, activation):
    @pl.when(pl.program_id(2) == 0)
    def _init():
        acc_ref[...] = jnp.zeros_like(acc_ref)

    acc_ref[...] += jnp.dot(x_ref[...], w_ref[...],
                            preferred_element_type=jnp.float32)

    @pl.when(pl.program_id(2) == pl.num_programs(2) - 1)
    def _finalize():
        y = acc_ref[...] + b_ref[...].astype(jnp.float32)
        if activation == "gelu":           # exact (erf) GELU, as in HF BERT/RoBERTa
            y = 0.5 * y * (1.0 + jax.lax.erf(y * (1.0 / math.sqrt(2.0))))
        elif activation == "tanh":
            y = jnp.tanh(y)
        o_ref[...] = y.astype(o_ref.dtype)


def linear(x, w, b, activation="none", out_dtype=jnp.bfloat16):
    m, k = x.shape
    k2, n = w.shape
    assert k == k2
    tm = _pick_tile(m, (256, 128))
    tn = _pick_tile(n, (256, 128))
    tk = _pick_tile(k, (512, 256, 128))
    grid = (m // tm, n // tn, k // tk)

    flops = 2 * m * n * k
    bytes_accessed = (m * k + k * n) * x.dtype.itemsize \
        + n * 4 + m * n * jnp.dtype(out_dtype).itemsize
    transcendentals = m * n if activation != "none" else 0

    return pl.pallas_call(
        functools.partial(_matmul_kernel, activation=activation),
        grid=grid,
        in_specs=[
            pl.BlockSpec((tm, tk), lambda i, j, kk: (i, kk)),
            pl.BlockSpec((tk, tn), lambda i, j, kk: (kk, j)),
            pl.BlockSpec((1, tn), lambda i, j, kk: (0, j)),
        ],
        out_specs=pl.BlockSpec((tm, tn), lambda i, j, kk: (i, j)),
        out_shape=jax.ShapeDtypeStruct((m, n), out_dtype),
        scratch_shapes=[pltpu.VMEM((tm, tn), jnp.float32)],
        compiler_params=pltpu.CompilerParams(
            dimension_semantics=("parallel", "parallel", "arbitrary")),
        cost_estimate=pl.CostEstimate(flops=flops,
                                      transcendentals=transcendentals,
                                      bytes_accessed=bytes_accessed),
    )(x, w, b)


# ---------------- (residual +) LayerNorm, gridded over row blocks ----------------

def _layernorm_kernel(*refs, eps, has_res):
    if has_res:
        y_ref, r_ref, g_ref, b_ref, o_ref = refs
        x = y_ref[...].astype(jnp.float32) + r_ref[...].astype(jnp.float32)
    else:
        y_ref, g_ref, b_ref, o_ref = refs
        x = y_ref[...].astype(jnp.float32)
    mu = jnp.mean(x, axis=-1, keepdims=True)
    var = jnp.mean(jnp.square(x - mu), axis=-1, keepdims=True)
    ynorm = (x - mu) * jax.lax.rsqrt(var + eps)
    o_ref[...] = (ynorm * g_ref[...] + b_ref[...]).astype(o_ref.dtype)


def layernorm(y, g, b, res=None, eps=1e-5, out_dtype=jnp.bfloat16):
    m, h = y.shape
    tm = _pick_tile(m, (512, 256, 128))
    row_spec = pl.BlockSpec((tm, h), lambda i: (i, 0))
    vec_spec = pl.BlockSpec((1, h), lambda i: (0, 0))
    args = (y,) + ((res,) if res is not None else ()) + (g, b)
    in_specs = [row_spec] + ([row_spec] if res is not None else []) + [vec_spec, vec_spec]
    return pl.pallas_call(
        functools.partial(_layernorm_kernel, eps=eps, has_res=res is not None),
        grid=(m // tm,),
        in_specs=in_specs,
        out_specs=row_spec,
        out_shape=jax.ShapeDtypeStruct((m, h), out_dtype),
        compiler_params=pltpu.CompilerParams(dimension_semantics=("parallel",)),
    )(*args)


# ---------------- self-attention (fused QKV input, per-batch grid) ----------------

def _attention_kernel(qkv_ref, bias_ref, o_ref, *, num_heads, head_dim, scale):
    s_len = qkv_ref.shape[1]
    h = num_heads * head_dim
    qkv = qkv_ref[0]                                    # (S, 3H) bf16, in VMEM
    bias_row = bias_ref[0].astype(jnp.float32)          # (1, S), broadcast over heads/q

    for hh in range(num_heads):                         # static unroll over heads
        lo = hh * head_dim
        qh = qkv[:, lo:lo + head_dim] * scale           # fold 1/sqrt(Dh) into q (bf16)
        kh = qkv[:, h + lo:h + lo + head_dim]
        vh = qkv[:, 2 * h + lo:2 * h + lo + head_dim]
        s = jax.lax.dot_general(qh, kh, (((1,), (1,)), ((), ())),
                                preferred_element_type=jnp.float32)   # (S, S)
        s = s + bias_row
        m = jnp.max(s, axis=-1, keepdims=True)
        p = jnp.exp(s - m)
        p = p * pl.reciprocal(jnp.sum(p, axis=-1, keepdims=True), approx=True)
        ctx = jnp.dot(p.astype(vh.dtype), vh,
                      preferred_element_type=jnp.float32)             # (S, Dh)
        o_ref[0, :, lo:lo + head_dim] = ctx.astype(o_ref.dtype)


def attention(qkv, bias, num_heads, head_dim):
    b, s, three_h = qkv.shape
    h = num_heads * head_dim
    assert three_h == 3 * h
    scale = 1.0 / math.sqrt(head_dim)
    flops = 4 * b * num_heads * s * s * head_dim
    return pl.pallas_call(
        functools.partial(_attention_kernel, num_heads=num_heads,
                          head_dim=head_dim, scale=scale),
        grid=(b,),
        in_specs=[
            pl.BlockSpec((1, s, three_h), lambda i: (i, 0, 0)),
            pl.BlockSpec((1, 1, s), lambda i: (i, 0, 0)),
        ],
        out_specs=pl.BlockSpec((1, s, h), lambda i: (i, 0, 0)),
        out_shape=jax.ShapeDtypeStruct((b, s, h), jnp.bfloat16),
        compiler_params=pltpu.CompilerParams(dimension_semantics=("parallel",)),
        cost_estimate=pl.CostEstimate(
            flops=flops,
            transcendentals=b * num_heads * s * s,
            bytes_accessed=qkv.size * 2 + bias.size * 4 + b * s * h * 2),
    )(qkv, bias)


# ---------------- fused pooler (dense + tanh) + classifier fc ----------------

def _pooler_fc_kernel(x_ref, pw_ref, pb_ref, fw_ref, fb_ref, o_ref):
    x = x_ref[...]
    pooled = jnp.tanh(jnp.dot(x, pw_ref[...], preferred_element_type=jnp.float32)
                      + pb_ref[...].astype(jnp.float32))
    # nn.Dropout(0.2) is identity at inference time.
    logits = jnp.dot(pooled.astype(fw_ref.dtype), fw_ref[...],
                     preferred_element_type=jnp.float32) + fb_ref[...].astype(jnp.float32)
    o_ref[...] = logits.astype(o_ref.dtype)


def pooler_fc(x_cls, pool_w, pool_b, fc_w_pad, fc_b_pad):
    b, h = x_cls.shape
    n_pad = fc_w_pad.shape[1]
    return pl.pallas_call(
        _pooler_fc_kernel,
        grid=(1,),
        in_specs=[
            pl.BlockSpec((b, h), lambda i: (0, 0)),
            pl.BlockSpec((h, h), lambda i: (0, 0)),
            pl.BlockSpec((1, h), lambda i: (0, 0)),
            pl.BlockSpec((h, n_pad), lambda i: (0, 0)),
            pl.BlockSpec((1, n_pad), lambda i: (0, 0)),
        ],
        out_specs=pl.BlockSpec((b, n_pad), lambda i: (0, 0)),
        out_shape=jax.ShapeDtypeStruct((b, n_pad), jnp.float32),
    )(x_cls, pool_w, pool_b, fc_w_pad, fc_b_pad)


# ---------------- model (glue in plain JAX, compute in Pallas) ----------------

def init_params(key, cfg):
    H, I, V, P, C = cfg["hidden"], cfg["inter"], cfg["vocab"], cfg["max_pos"], cfg["classes"]
    c_pad = ((C + 127) // 128) * 128
    keys = iter(jax.random.split(key, 5 + 4 * cfg["layers"]))

    def nrm(shape, dtype=jnp.bfloat16):
        return (0.02 * jax.random.normal(next(keys), shape, jnp.float32)).astype(dtype)

    p = {
        "word_emb": nrm((V, H), jnp.float32),
        "pos_emb": nrm((P, H), jnp.float32),
        "type_emb": nrm((1, H), jnp.float32),
        "emb_ln_g": jnp.ones((1, H), jnp.float32),
        "emb_ln_b": jnp.zeros((1, H), jnp.float32),
        "layers": [],
    }
    for _ in range(cfg["layers"]):
        p["layers"].append({
            # fused QKV projection: [Wq | Wk | Wv] along N
            "w_qkv": nrm((H, 3 * H)), "b_qkv": jnp.zeros((1, 3 * H), jnp.float32),
            "wo": nrm((H, H)), "bo": jnp.zeros((1, H), jnp.float32),
            "ln1_g": jnp.ones((1, H), jnp.float32), "ln1_b": jnp.zeros((1, H), jnp.float32),
            "wi": nrm((H, I)), "bi": jnp.zeros((1, I), jnp.float32),
            "wd": nrm((I, H)), "bd": jnp.zeros((1, H), jnp.float32),
            "ln2_g": jnp.ones((1, H), jnp.float32), "ln2_b": jnp.zeros((1, H), jnp.float32),
        })
    p["pool_w"] = nrm((H, H))
    p["pool_b"] = jnp.zeros((1, H), jnp.float32)
    fc_w = nrm((H, C))
    p["fc_w"] = jnp.zeros((H, c_pad), jnp.bfloat16).at[:, :C].set(fc_w)   # lane-padded
    p["fc_b"] = jnp.zeros((1, c_pad), jnp.float32)
    return p


def bert_classifier_forward(params, input_ids, attention_mask, cfg):
    B, S = input_ids.shape
    H = cfg["hidden"]; nH = cfg["heads"]; Dh = H // nH
    assert nH * Dh == H
    pad = cfg["pad_token_id"]

    mask = attention_mask.astype(jnp.int32)

    # --- embeddings (gathers stay in plain-JAX glue) ---
    # RoBERTa/PhoBERT-style position ids: cumsum over non-pad tokens, offset by padding_idx.
    position_ids = jnp.cumsum(mask, axis=1) * mask + pad
    emb = (jnp.take(params["word_emb"], input_ids, axis=0)
           + jnp.take(params["pos_emb"], position_ids, axis=0)
           + params["type_emb"][0])                          # token_type_ids == 0
    h = layernorm(emb.reshape(B * S, H).astype(jnp.bfloat16),
                  params["emb_ln_g"], params["emb_ln_b"])

    # compact additive attention-mask bias; broadcast over heads/query inside the kernel
    bias = ((1.0 - mask.astype(jnp.float32)) * -1e9).reshape(B, 1, S)

    for lyr in params["layers"]:
        x = h                                                # (B*S, H) bf16
        qkv = linear(x, lyr["w_qkv"], lyr["b_qkv"])          # fused QKV -> (B*S, 3H)
        ctx = attention(qkv.reshape(B, S, 3 * H), bias, nH, Dh)  # (B, S, H)
        attn_out = linear(ctx.reshape(B * S, H), lyr["wo"], lyr["bo"])
        h = layernorm(attn_out, lyr["ln1_g"], lyr["ln1_b"], res=x)    # fused residual

        ff = linear(h, lyr["wi"], lyr["bi"], activation="gelu")
        ff = linear(ff, lyr["wd"], lyr["bd"])
        h = layernorm(ff, lyr["ln2_g"], lyr["ln2_b"], res=h)          # fused residual

    # --- pooler (dense + tanh on <s>/CLS token) + dropout(eval=identity) + fc, fused ---
    cls = h.reshape(B, S, H)[:, 0, :]
    logits_pad = pooler_fc(cls, params["pool_w"], params["pool_b"],
                           params["fc_w"], params["fc_b"])
    # TODO(synk): training-mode stochastic dropout not implemented (eval semantics only).
    return logits_pad[:, :cfg["classes"]]


if __name__ == "__main__":
    # Small but TPU-tile-friendly config (hidden multiple of 128 so lane blocks are dense).
    cfg = dict(vocab=64, hidden=128, heads=2, layers=2, inter=256,
               max_pos=40, classes=5, pad_token_id=1)
    B, S = 2, 8

    key = jax.random.PRNGKey(0)
    pkey, ikey = jax.random.split(key)
    params = init_params(pkey, cfg)

    input_ids = jax.random.randint(ikey, (B, S), 2, cfg["vocab"], dtype=jnp.int32)
    attention_mask = jnp.ones((B, S), jnp.int32).at[1, 6:].set(0)   # pad tail of 2nd example
    input_ids = jnp.where(attention_mask == 1, input_ids, cfg["pad_token_id"])

    fwd = jax.jit(lambda p, ids, m: bert_classifier_forward(p, ids, m, cfg))
    logits = fwd(params, input_ids, attention_mask)
    jax.block_until_ready(logits)
    assert logits.shape == (B, cfg["classes"])
    print("KERNEL_OK")
</pallas_src>

<mosaic_0001>
module attributes {stable_mosaic.version = 11 : i64} {
  func.func @_matmul_kernel(%arg0: i32, %arg1: i32, %arg2: i32, %arg3: memref<16x128xbf16, #tpu.memory_space<vmem>>, %arg4: memref<128x128xbf16, #tpu.memory_space<vmem>>, %arg5: memref<1x128xf32, #tpu.memory_space<vmem>>, %arg6: memref<16x128xbf16, #tpu.memory_space<vmem>>, %arg7: memref<16x128xf32, #tpu.memory_space<vmem>>) attributes {dimension_semantics = [#tpu.dimension_semantics<parallel>, #tpu.dimension_semantics<parallel>, #tpu.dimension_semantics<arbitrary>], iteration_bounds = array<i64: 1, 3, 1>, scalar_prefetch = 0 : i64, scratch_operands = 1 : i64, tpu.core_type = #tpu.core_type<tc>, window_params = [{transform_indices = @transform_0, window_bounds = array<i64: 16, 128>}, {transform_indices = @transform_1, window_bounds = array<i64: 128, 128>}, {transform_indices = @transform_2, window_bounds = array<i64: 1, 128>}, {transform_indices = @transform_3, window_bounds = array<i64: 16, 128>}]} {
    %c0_i32 = arith.constant 0 : i32
    %0 = arith.cmpi eq, %arg2, %c0_i32 : i32
    %1 = arith.extui %0 : i1 to i32
    %c0_i32_0 = arith.constant 0 : i32
    %2 = arith.cmpi ne, %1, %c0_i32_0 : i32
    scf.if %2 {
      %cst_10 = arith.constant 0.000000e+00 : f32
      %12 = vector.broadcast %cst_10 : f32 to vector<16x128xf32>
      %c0_11 = arith.constant 0 : index
      %c0_12 = arith.constant 0 : index
      %13 = vector.load %arg7[%c0_11, %c0_12] : memref<16x128xf32, #tpu.memory_space<vmem>>, vector<16x128xf32>
      tpu.vector_store %arg7[%c0_11, %c0_12], %12 {strides = array<i32>} : memref<16x128xf32, #tpu.memory_space<vmem>>, vector<16x128xf32>,
    } else {
    }
    %c0 = arith.constant 0 : index
    %c0_1 = arith.constant 0 : index
    %3 = vector.load %arg7[%c0, %c0_1] : memref<16x128xf32, #tpu.memory_space<vmem>>, vector<16x128xf32>
    %c0_2 = arith.constant 0 : index
    %c0_3 = arith.constant 0 : index
    %4 = vector.load %arg3[%c0_2, %c0_3] : memref<16x128xbf16, #tpu.memory_space<vmem>>, vector<16x128xbf16>
    %c0_4 = arith.constant 0 : index
    %c0_5 = arith.constant 0 : index
    %5 = vector.load %arg4[%c0_4, %c0_5] : memref<128x128xbf16, #tpu.memory_space<vmem>>, vector<128x128xbf16>
    %cst = arith.constant dense<0.000000e+00> : vector<16x128xf32>
    %6 = tpu.matmul %4, %5, %cst {dimension_numbers = #tpu.dot_dimension_numbers<[1], [0], [0], [1], [0, 0, 1, 1], [], []>} : vector<16x128xbf16>, vector<128x128xbf16>, vector<16x128xf32> -> vector<16x128xf32>
    %7 = arith.addf %3, %6 : vector<16x128xf32>
    %c0_6 = arith.constant 0 : index
    %c0_7 = arith.constant 0 : index
    %8 = vector.load %arg7[%c0_6, %c0_7] : memref<16x128xf32, #tpu.memory_space<vmem>>, vector<16x128xf32>
    tpu.vector_store %arg7[%c0_6, %c0_7], %7 {strides = array<i32>} : memref<16x128xf32, #tpu.memory_space<vmem>>, vector<16x128xf32>,
    %c0_i32_8 = arith.constant 0 : i32
    %9 = arith.cmpi eq, %arg2, %c0_i32_8 : i32
    %10 = arith.extui %9 : i1 to i32
    %c0_i32_9 = arith.constant 0 : i32
    %11 = arith.cmpi ne, %10, %c0_i32_9 : i32
    scf.if %11 {
      %c0_10 = arith.constant 0 : index
      %c0_11 = arith.constant 0 : index
      %12 = vector.load %arg7[%c0_10, %c0_11] : memref<16x128xf32, #tpu.memory_space<vmem>>, vector<16x128xf32>
      %c0_12 = arith.constant 0 : index
      %c0_13 = arith.constant 0 : index
      %13 = vector.load %arg5[%c0_12, %c0_13] : memref<1x128xf32, #tpu.memory_space<vmem>>, vector<1x128xf32>
      %14 = vector.broadcast %13 : vector<1x128xf32> to vector<16x128xf32>
      %15 = arith.addf %12, %14 : vector<16x128xf32>
      %16 = arith.truncf %15 : vector<16x128xf32> to vector<16x128xbf16>
      %c0_14 = arith.constant 0 : index
      %c0_15 = arith.constant 0 : index
      %17 = vector.load %arg6[%c0_14, %c0_15] : memref<16x128xbf16, #tpu.memory_space<vmem>>, vector<16x128xbf16>
      tpu.vector_store %arg6[%c0_14, %c0_15], %16 {strides = array<i32>} : memref<16x128xbf16, #tpu.memory_space<vmem>>, vector<16x128xbf16>,
    } else {
    }
    return
  }
  func.func @transform_0(%arg0: i32, %arg1: i32, %arg2: i32) -> (i32, i32) {
    %c0_i32 = arith.constant 0 : i32
    return %arg0, %arg2 : i32, i32
  }
  func.func @transform_1(%arg0: i32, %arg1: i32, %arg2: i32) -> (i32, i32) {
    %c0_i32 = arith.constant 0 : i32
    return %arg2, %arg1 : i32, i32
  }
  func.func @transform_2(%arg0: i32, %arg1: i32, %arg2: i32) -> (i32, i32) {
    %c0_i32 = arith.constant 0 : i32
    %c0_i32_0 = arith.constant 0 : i32
    return %c0_i32, %arg1 : i32, i32
  }
  func.func @transform_3(%arg0: i32, %arg1: i32, %arg2: i32) -> (i32, i32) {
    %c0_i32 = arith.constant 0 : i32
    return %arg0, %arg1 : i32, i32
  }
}

module attributes {stable_mosaic.version = 11 : i64} {
  func.func @_layernorm_kernel(%arg0: i32, %arg1: memref<16x128xbf16, #tpu.memory_space<vmem>>, %arg2: memref<1x128xf32, #tpu.memory_space<vmem>>, %arg3: memref<1x128xf32, #tpu.memory_space<vmem>>, %arg4: memref<16x128xbf16, #tpu.memory_space<vmem>>) attributes {dimension_semantics = [#tpu.dimension_semantics<parallel>], iteration_bounds = array<i64: 1>, scalar_prefetch = 0 : i64, scratch_operands = 0 : i64, tpu.core_type = #tpu.core_type<tc>, window_params = [{transform_indices = @transform_0, window_bounds = array<i64: 16, 128>}, {pipeline_mode = #tpu.pipeline_mode<synchronous>, transform_indices = @transform_1, window_bounds = array<i64: 1, 128>}, {pipeline_mode = #tpu.pipeline_mode<synchronous>, transform_indices = @transform_2, window_bounds = array<i64: 1, 128>}, {transform_indices = @transform_3, window_bounds = array<i64: 16, 128>}]} {
    %c0 = arith.constant 0 : index
    %c0_0 = arith.constant 0 : index
    %0 = vector.load %arg1[%c0, %c0_0] : memref<16x128xbf16, #tpu.memory_space<vmem>>, vector<16x128xbf16>
    %1 = arith.extf %0 : vector<16x128xbf16> to vector<16x128xf32>
    %cst = arith.constant dense<0.000000e+00> : vector<16xf32>
    %2 = vector.multi_reduction <add>, %1, %cst [1] : vector<16x128xf32> to vector<16xf32>
    %3 = vector.shape_cast %2 : vector<16xf32> to vector<16x1xf32>
    %cst_1 = arith.constant 1.280000e+02 : f32
    %4 = vector.broadcast %cst_1 : f32 to vector<16x1xf32>
    %5 = arith.divf %3, %4 : vector<16x1xf32>
    %6 = vector.broadcast %5 : vector<16x1xf32> to vector<16x128xf32>
    %7 = arith.subf %1, %6 : vector<16x128xf32>
    %8 = arith.mulf %7, %7 : vector<16x128xf32>
    %cst_2 = arith.constant dense<0.000000e+00> : vector<16xf32>
    %9 = vector.multi_reduction <add>, %8, %cst_2 [1] : vector<16x128xf32> to vector<16xf32>
    %10 = vector.shape_cast %9 : vector<16xf32> to vector<16x1xf32>
    %cst_3 = arith.constant 1.280000e+02 : f32
    %11 = vector.broadcast %cst_3 : f32 to vector<16x1xf32>
    %12 = arith.divf %10, %11 : vector<16x1xf32>
    %13 = vector.broadcast %5 : vector<16x1xf32> to vector<16x128xf32>
    %14 = arith.subf %1, %13 : vector<16x128xf32>
    %cst_4 = arith.constant 9.99999974E-6 : f32
    %15 = vector.broadcast %cst_4 : f32 to vector<16x1xf32>
    %16 = arith.addf %12, %15 : vector<16x1xf32>
    %17 = math.rsqrt %16 : vector<16x1xf32>
    %18 = vector.broadcast %17 : vector<16x1xf32> to vector<16x128xf32>
    %19 = arith.mulf %14, %18 : vector<16x128xf32>
    %c0_5 = arith.constant 0 : index
    %c0_6 = arith.constant 0 : index
    %20 = vector.load %arg2[%c0_5, %c0_6] : memref<1x128xf32, #tpu.memory_space<vmem>>, vector<1x128xf32>
    %21 = vector.broadcast %20 : vector<1x128xf32> to vector<16x128xf32>
    %22 = arith.mulf %19, %21 : vector<16x128xf32>
    %c0_7 = arith.constant 0 : index
    %c0_8 = arith.constant 0 : index
    %23 = vector.load %arg3[%c0_7, %c0_8] : memref<1x128xf32, #tpu.memory_space<vmem>>, vector<1x128xf32>
    %24 = vector.broadcast %23 : vector<1x128xf32> to vector<16x128xf32>
    %25 = arith.addf %22, %24 : vector<16x128xf32>
    %26 = arith.truncf %25 : vector<16x128xf32> to vector<16x128xbf16>
    %c0_9 = arith.constant 0 : index
    %c0_10 = arith.constant 0 : index
    %27 = vector.load %arg4[%c0_9, %c0_10] : memref<16x128xbf16, #tpu.memory_space<vmem>>, vector<16x128xbf16>
    tpu.vector_store %arg4[%c0_9, %c0_10], %26 {strides = array<i32>} : memref<16x128xbf16, #tpu.memory_space<vmem>>, vector<16x128xbf16>,
    return
  }
  func.func @transform_0(%arg0: i32) -> (i32, i32) {
    %c0_i32 = arith.constant 0 : i32
    %c0_i32_0 = arith.constant 0 : i32
    return %arg0, %c0_i32 : i32, i32
  }
  func.func @transform_1(%arg0: i32) -> (i32, i32) {
    %c0_i32 = arith.constant 0 : i32
    %c0_i32_0 = arith.constant 0 : i32
    %c0_i32_1 = arith.constant 0 : i32
    return %c0_i32, %c0_i32_0 : i32, i32
  }
  func.func @transform_2(%arg0: i32) -> (i32, i32) {
    %c0_i32 = arith.constant 0 : i32
    %c0_i32_0 = arith.constant 0 : i32
    %c0_i32_1 = arith.constant 0 : i32
    return %c0_i32, %c0_i32_0 : i32, i32
  }
  func.func @transform_3(%arg0: i32) -> (i32, i32) {
    %c0_i32 = arith.constant 0 : i32
    %c0_i32_0 = arith.constant 0 : i32
    return %arg0, %c0_i32 : i32, i32
  }
}

module attributes {stable_mosaic.version = 11 : i64} {
  func.func @_matmul_kernel(%arg0: i32, %arg1: i32, %arg2: i32, %arg3: memref<16x128xbf16, #tpu.memory_space<vmem>>, %arg4: memref<128x128xbf16, #tpu.memory_space<vmem>>, %arg5: memref<1x128xf32, #tpu.memory_space<vmem>>, %arg6: memref<16x128xbf16, #tpu.memory_space<vmem>>, %arg7: memref<16x128xf32, #tpu.memory_space<vmem>>) attributes {dimension_semantics = [#tpu.dimension_semantics<parallel>, #tpu.dimension_semantics<parallel>, #tpu.dimension_semantics<arbitrary>], iteration_bounds = array<i64: 1, 1, 1>, scalar_prefetch = 0 : i64, scratch_operands = 1 : i64, tpu.core_type = #tpu.core_type<tc>, window_params = [{transform_indices = @transform_0, window_bounds = array<i64: 16, 128>}, {transform_indices = @transform_1, window_bounds = array<i64: 128, 128>}, {transform_indices = @transform_2, window_bounds = array<i64: 1, 128>}, {transform_indices = @transform_3, window_bounds = array<i64: 16, 128>}]} {
    %c0_i32 = arith.constant 0 : i32
    %0 = arith.cmpi eq, %arg2, %c0_i32 : i32
    %1 = arith.extui %0 : i1 to i32
    %c0_i32_0 = arith.constant 0 : i32
    %2 = arith.cmpi ne, %1, %c0_i32_0 : i32
    scf.if %2 {
      %cst_10 = arith.constant 0.000000e+00 : f32
      %12 = vector.broadcast %cst_10 : f32 to vector<16x128xf32>
      %c0_11 = arith.constant 0 : index
      %c0_12 = arith.constant 0 : index
      %13 = vector.load %arg7[%c0_11, %c0_12] : memref<16x128xf32, #tpu.memory_space<vmem>>, vector<16x128xf32>
      tpu.vector_store %arg7[%c0_11, %c0_12], %12 {strides = array<i32>} : memref<16x128xf32, #tpu.memory_space<vmem>>, vector<16x128xf32>,
    } else {
    }
    %c0 = arith.constant 0 : index
    %c0_1 = arith.constant 0 : index
    %3 = vector.load %arg7[%c0, %c0_1] : memref<16x128xf32, #tpu.memory_space<vmem>>, vector<16x128xf32>
    %c0_2 = arith.constant 0 : index
    %c0_3 = arith.constant 0 : index
    %4 = vector.load %arg3[%c0_2, %c0_3] : memref<16x128xbf16, #tpu.memory_space<vmem>>, vector<16x128xbf16>
    %c0_4 = arith.constant 0 : index
    %c0_5 = arith.constant 0 : index
    %5 = vector.load %arg4[%c0_4, %c0_5] : memref<128x128xbf16, #tpu.memory_space<vmem>>, vector<128x128xbf16>
    %cst = arith.constant dense<0.000000e+00> : vector<16x128xf32>
    %6 = tpu.matmul %4, %5, %cst {dimension_numbers = #tpu.dot_dimension_numbers<[1], [0], [0], [1], [0, 0, 1, 1], [], []>} : vector<16x128xbf16>, vector<128x128xbf16>, vector<16x128xf32> -> vector<16x128xf32>
    %7 = arith.addf %3, %6 : vector<16x128xf32>
    %c0_6 = arith.constant 0 : index
    %c0_7 = arith.constant 0 : index
    %8 = vector.load %arg7[%c0_6, %c0_7] : memref<16x128xf32, #tpu.memory_space<vmem>>, vector<16x128xf32>
    tpu.vector_store %arg7[%c0_6, %c0_7], %7 {strides = array<i32>} : memref<16x128xf32, #tpu.memory_space<vmem>>, vector<16x128xf32>,
    %c0_i32_8 = arith.constant 0 : i32
    %9 = arith.cmpi eq, %arg2, %c0_i32_8 : i32
    %10 = arith.extui %9 : i1 to i32
    %c0_i32_9 = arith.constant 0 : i32
    %11 = arith.cmpi ne, %10, %c0_i32_9 : i32
    scf.if %11 {
      %c0_10 = arith.constant 0 : index
      %c0_11 = arith.constant 0 : index
      %12 = vector.load %arg7[%c0_10, %c0_11] : memref<16x128xf32, #tpu.memory_space<vmem>>, vector<16x128xf32>
      %c0_12 = arith.constant 0 : index
      %c0_13 = arith.constant 0 : index
      %13 = vector.load %arg5[%c0_12, %c0_13] : memref<1x128xf32, #tpu.memory_space<vmem>>, vector<1x128xf32>
      %14 = vector.broadcast %13 : vector<1x128xf32> to vector<16x128xf32>
      %15 = arith.addf %12, %14 : vector<16x128xf32>
      %16 = arith.truncf %15 : vector<16x128xf32> to vector<16x128xbf16>
      %c0_14 = arith.constant 0 : index
      %c0_15 = arith.constant 0 : index
      %17 = vector.load %arg6[%c0_14, %c0_15] : memref<16x128xbf16, #tpu.memory_space<vmem>>, vector<16x128xbf16>
      tpu.vector_store %arg6[%c0_14, %c0_15], %16 {strides = array<i32>} : memref<16x128xbf16, #tpu.memory_space<vmem>>, vector<16x128xbf16>,
    } else {
    }
    return
  }
  func.func @transform_0(%arg0: i32, %arg1: i32, %arg2: i32) -> (i32, i32) {
    %c0_i32 = arith.constant 0 : i32
    return %arg0, %arg2 : i32, i32
  }
  func.func @transform_1(%arg0: i32, %arg1: i32, %arg2: i32) -> (i32, i32) {
    %c0_i32 = arith.constant 0 : i32
    return %arg2, %arg1 : i32, i32
  }
  func.func @transform_2(%arg0: i32, %arg1: i32, %arg2: i32) -> (i32, i32) {
    %c0_i32 = arith.constant 0 : i32
    %c0_i32_0 = arith.constant 0 : i32
    return %c0_i32, %arg1 : i32, i32
  }
  func.func @transform_3(%arg0: i32, %arg1: i32, %arg2: i32) -> (i32, i32) {
    %c0_i32 = arith.constant 0 : i32
    return %arg0, %arg1 : i32, i32
  }
}

module attributes {stable_mosaic.version = 11 : i64} {
  func.func @_attention_kernel(%arg0: i32, %arg1: memref<1x8x384xbf16, #tpu.memory_space<vmem>>, %arg2: memref<1x1x8xf32, #tpu.memory_space<vmem>>, %arg3: memref<1x8x128xbf16, #tpu.memory_space<vmem>>) attributes {dimension_semantics = [#tpu.dimension_semantics<parallel>], iteration_bounds = array<i64: 2>, scalar_prefetch = 0 : i64, scratch_operands = 0 : i64, tpu.core_type = #tpu.core_type<tc>, window_params = [{transform_indices = @transform_0, window_bounds = array<i64: 1, 8, 384>}, {transform_indices = @transform_1, window_bounds = array<i64: 1, 1, 8>}, {transform_indices = @transform_2, window_bounds = array<i64: 1, 8, 128>}]} {
    %c0 = arith.constant 0 : index
    %c0_0 = arith.constant 0 : index
    %c0_1 = arith.constant 0 : index
    %0 = vector.load %arg1[%c0, %c0_0, %c0_1] : memref<1x8x384xbf16, #tpu.memory_space<vmem>>, vector<1x8x384xbf16>
    %1 = vector.shape_cast %0 : vector<1x8x384xbf16> to vector<8x384xbf16>
    %c0_2 = arith.constant 0 : index
    %c0_3 = arith.constant 0 : index
    %c0_4 = arith.constant 0 : index
    %2 = vector.load %arg2[%c0_2, %c0_3, %c0_4] : memref<1x1x8xf32, #tpu.memory_space<vmem>>, vector<1x1x8xf32>
    %3 = vector.shape_cast %2 : vector<1x1x8xf32> to vector<1x8xf32>
    %4 = vector.extract_strided_slice %1 {offsets = [0, 0], sizes = [8, 64], strides = [1, 1]} : vector<8x384xbf16> to vector<8x64xbf16>
    %cst = arith.constant 1.250000e-01 : bf16
    %5 = vector.broadcast %cst : bf16 to vector<8x64xbf16>
    %6 = arith.mulf %4, %5 : vector<8x64xbf16>
    %7 = vector.extract_strided_slice %1 {offsets = [0, 128], sizes = [8, 64], strides = [1, 1]} : vector<8x384xbf16> to vector<8x64xbf16>
    %8 = vector.extract_strided_slice %1 {offsets = [0, 256], sizes = [8, 64], strides = [1, 1]} : vector<8x384xbf16> to vector<8x64xbf16>
    %cst_5 = arith.constant dense<0.000000e+00> : vector<8x8xf32>
    %9 = tpu.matmul %6, %7, %cst_5 {dimension_numbers = #tpu.dot_dimension_numbers<[1], [1], [0], [0], [0, 0, 1, 0], [], []>} : vector<8x64xbf16>, vector<8x64xbf16>, vector<8x8xf32> -> vector<8x8xf32>
    %10 = vector.broadcast %3 : vector<1x8xf32> to vector<8x8xf32>
    %11 = arith.addf %9, %10 : vector<8x8xf32>
    %cst_6 = arith.constant dense<0xFF800000> : vector<8xf32>
    %12 = vector.multi_reduction <maximumf>, %11, %cst_6 [1] : vector<8x8xf32> to vector<8xf32>
    %13 = vector.shape_cast %12 : vector<8xf32> to vector<8x1xf32>
    %14 = vector.broadcast %13 : vector<8x1xf32> to vector<8x8xf32>
    %15 = arith.subf %11, %14 : vector<8x8xf32>
    %16 = math.exp %15 : vector<8x8xf32>
    %cst_7 = arith.constant dense<0.000000e+00> : vector<8xf32>
    %17 = vector.multi_reduction <add>, %16, %cst_7 [1] : vector<8x8xf32> to vector<8xf32>
    %18 = vector.shape_cast %17 : vector<8xf32> to vector<8x1xf32>
    %19 = tpu.reciprocal %18 {approx = true} : vector<8x1xf32> -> vector<8x1xf32>
    %20 = vector.broadcast %19 : vector<8x1xf32> to vector<8x8xf32>
    %21 = arith.mulf %16, %20 : vector<8x8xf32>
    %22 = arith.truncf %21 : vector<8x8xf32> to vector<8x8xbf16>
    %cst_8 = arith.constant dense<0.000000e+00> : vector<8x64xf32>
    %23 = tpu.matmul %22, %8, %cst_8 {dimension_numbers = #tpu.dot_dimension_numbers<[1], [0], [0], [1], [0, 0, 1, 1], [], []>} : vector<8x8xbf16>, vector<8x64xbf16>, vector<8x64xf32> -> vector<8x64xf32>
    %24 = arith.truncf %23 : vector<8x64xf32> to vector<8x64xbf16>
    %c0_9 = arith.constant 0 : index
    %c0_10 = arith.constant 0 : index
    %c0_11 = arith.constant 0 : index
    %25 = vector.load %arg3[%c0_9, %c0_10, %c0_11] : memref<1x8x128xbf16, #tpu.memory_space<vmem>>, vector<1x8x64xbf16>
    %26 = vector.shape_cast %25 : vector<1x8x64xbf16> to vector<8x64xbf16>
    %27 = vector.shape_cast %24 : vector<8x64xbf16> to vector<1x8x64xbf16>
    tpu.vector_store %arg3[%c0_9, %c0_10, %c0_11], %27 {strides = array<i32>} : memref<1x8x128xbf16, #tpu.memory_space<vmem>>, vector<1x8x64xbf16>,
    %28 = vector.extract_strided_slice %1 {offsets = [0, 64], sizes = [8, 64], strides = [1, 1]} : vector<8x384xbf16> to vector<8x64xbf16>
    %cst_12 = arith.constant 1.250000e-01 : bf16
    %29 = vector.broadcast %cst_12 : bf16 to vector<8x64xbf16>
    %30 = arith.mulf %28, %29 : vector<8x64xbf16>
    %31 = vector.extract_strided_slice %1 {offsets = [0, 192], sizes = [8, 64], strides = [1, 1]} : vector<8x384xbf16> to vector<8x64xbf16>
    %32 = vector.extract_strided_slice %1 {offsets = [0, 320], sizes = [8, 64], strides = [1, 1]} : vector<8x384xbf16> to vector<8x64xbf16>
    %cst_13 = arith.constant dense<0.000000e+00> : vector<8x8xf32>
    %33 = tpu.matmul %30, %31, %cst_13 {dimension_numbers = #tpu.dot_dimension_numbers<[1], [1], [0], [0], [0, 0, 1, 0], [], []>} : vector<8x64xbf16>, vector<8x64xbf16>, vector<8x8xf32> -> vector<8x8xf32>
    %34 = vector.broadcast %3 : vector<1x8xf32> to vector<8x8xf32>
    %35 = arith.addf %33, %34 : vector<8x8xf32>
    %cst_14 = arith.constant dense<0xFF800000> : vector<8xf32>
    %36 = vector.multi_reduction <maximumf>, %35, %cst_14 [1] : vector<8x8xf32> to vector<8xf32>
    %37 = vector.shape_cast %36 : vector<8xf32> to vector<8x1xf32>
    %38 = vector.broadcast %37 : vector<8x1xf32> to vector<8x8xf32>
    %39 = arith.subf %35, %38 : vector<8x8xf32>
    %40 = math.exp %39 : vector<8x8xf32>
    %cst_15 = arith.constant dense<0.000000e+00> : vector<8xf32>
    %41 = vector.multi_reduction <add>, %40, %cst_15 [1] : vector<8x8xf32> to vector<8xf32>
    %42 = vector.shape_cast %41 : vector<8xf32> to vector<8x1xf32>
    %43 = tpu.reciprocal %42 {approx = true} : vector<8x1xf32> -> vector<8x1xf32>
    %44 = vector.broadcast %43 : vector<8x1xf32> to vector<8x8xf32>
    %45 = arith.mulf %40, %44 : vector<8x8xf32>
    %46 = arith.truncf %45 : vector<8x8xf32> to vector<8x8xbf16>
    %cst_16 = arith.constant dense<0.000000e+00> : vector<8x64xf32>
    %47 = tpu.matmul %46, %32, %cst_16 {dimension_numbers = #tpu.dot_dimension_numbers<[1], [0], [0], [1], [0, 0, 1, 1], [], []>} : vector<8x8xbf16>, vector<8x64xbf16>, vector<8x64xf32> -> vector<8x64xf32>
    %48 = arith.truncf %47 : vector<8x64xf32> to vector<8x64xbf16>
    %c0_17 = arith.constant 0 : index
    %c0_18 = arith.constant 0 : index
    %c64 = arith.constant 64 : index
    %49 = vector.load %arg3[%c0_17, %c0_18, %c64] : memref<1x8x128xbf16, #tpu.memory_space<vmem>>, vector<1x8x64xbf16>
    %50 = vector.shape_cast %49 : vector<1x8x64xbf16> to vector<8x64xbf16>
    %51 = vector.shape_cast %48 : vector<8x64xbf16> to vector<1x8x64xbf16>
    tpu.vector_store %arg3[%c0_17, %c0_18, %c64], %51 {strides = array<i32>} : memref<1x8x128xbf16, #tpu.memory_space<vmem>>, vector<1x8x64xbf16>,
    return
  }
  func.func @transform_0(%arg0: i32) -> (i32, i32, i32) {
    %c0_i32 = arith.constant 0 : i32
    %c0_i32_0 = arith.constant 0 : i32
    %c0_i32_1 = arith.constant 0 : i32
    return %arg0, %c0_i32, %c0_i32_0 : i32, i32, i32
  }
  func.func @transform_1(%arg0: i32) -> (i32, i32, i32) {
    %c0_i32 = arith.constant 0 : i32
    %c0_i32_0 = arith.constant 0 : i32
    %c0_i32_1 = arith.constant 0 : i32
    return %arg0, %c0_i32, %c0_i32_0 : i32, i32, i32
  }
  func.func @transform_2(%arg0: i32) -> (i32, i32, i32) {
    %c0_i32 = arith.constant 0 : i32
    %c0_i32_0 = arith.constant 0 : i32
    %c0_i32_1 = arith.constant 0 : i32
    return %arg0, %c0_i32, %c0_i32_0 : i32, i32, i32
  }
}

module attributes {stable_mosaic.version = 11 : i64} {
  func.func @_layernorm_kernel(%arg0: i32, %arg1: memref<16x128xbf16, #tpu.memory_space<vmem>>, %arg2: memref<16x128xbf16, #tpu.memory_space<vmem>>, %arg3: memref<1x128xf32, #tpu.memory_space<vmem>>, %arg4: memref<1x128xf32, #tpu.memory_space<vmem>>, %arg5: memref<16x128xbf16, #tpu.memory_space<vmem>>) attributes {dimension_semantics = [#tpu.dimension_semantics<parallel>], iteration_bounds = array<i64: 1>, scalar_prefetch = 0 : i64, scratch_operands = 0 : i64, tpu.core_type = #tpu.core_type<tc>, window_params = [{transform_indices = @transform_0, window_bounds = array<i64: 16, 128>}, {transform_indices = @transform_1, window_bounds = array<i64: 16, 128>}, {pipeline_mode = #tpu.pipeline_mode<synchronous>, transform_indices = @transform_2, window_bounds = array<i64: 1, 128>}, {pipeline_mode = #tpu.pipeline_mode<synchronous>, transform_indices = @transform_3, window_bounds = array<i64: 1, 128>}, {transform_indices = @transform_4, window_bounds = array<i64: 16, 128>}]} {
    %c0 = arith.constant 0 : index
    %c0_0 = arith.constant 0 : index
    %0 = vector.load %arg1[%c0, %c0_0] : memref<16x128xbf16, #tpu.memory_space<vmem>>, vector<16x128xbf16>
    %1 = arith.extf %0 : vector<16x128xbf16> to vector<16x128xf32>
    %c0_1 = arith.constant 0 : index
    %c0_2 = arith.constant 0 : index
    %2 = vector.load %arg2[%c0_1, %c0_2] : memref<16x128xbf16, #tpu.memory_space<vmem>>, vector<16x128xbf16>
    %3 = arith.extf %2 : vector<16x128xbf16> to vector<16x128xf32>
    %4 = arith.addf %1, %3 : vector<16x128xf32>
    %cst = arith.constant dense<0.000000e+00> : vector<16xf32>
    %5 = vector.multi_reduction <add>, %4, %cst [1] : vector<16x128xf32> to vector<16xf32>
    %6 = vector.shape_cast %5 : vector<16xf32> to vector<16x1xf32>
    %cst_3 = arith.constant 1.280000e+02 : f32
    %7 = vector.broadcast %cst_3 : f32 to vector<16x1xf32>
    %8 = arith.divf %6, %7 : vector<16x1xf32>
    %9 = vector.broadcast %8 : vector<16x1xf32> to vector<16x128xf32>
    %10 = arith.subf %4, %9 : vector<16x128xf32>
    %11 = arith.mulf %10, %10 : vector<16x128xf32>
    %cst_4 = arith.constant dense<0.000000e+00> : vector<16xf32>
    %12 = vector.multi_reduction <add>, %11, %cst_4 [1] : vector<16x128xf32> to vector<16xf32>
    %13 = vector.shape_cast %12 : vector<16xf32> to vector<16x1xf32>
    %cst_5 = arith.constant 1.280000e+02 : f32
    %14 = vector.broadcast %cst_5 : f32 to vector<16x1xf32>
    %15 = arith.divf %13, %14 : vector<16x1xf32>
    %16 = vector.broadcast %8 : vector<16x1xf32> to vector<16x128xf32>
    %17 = arith.subf %4, %16 : vector<16x128xf32>
    %cst_6 = arith.constant 9.99999974E-6 : f32
    %18 = vector.broadcast %cst_6 : f32 to vector<16x1xf32>
    %19 = arith.addf %15, %18 : vector<16x1xf32>
    %20 = math.rsqrt %19 : vector<16x1xf32>
    %21 = vector.broadcast %20 : vector<16x1xf32> to vector<16x128xf32>
    %22 = arith.mulf %17, %21 : vector<16x128xf32>
    %c0_7 = arith.constant 0 : index
    %c0_8 = arith.constant 0 : index
    %23 = vector.load %arg3[%c0_7, %c0_8] : memref<1x128xf32, #tpu.memory_space<vmem>>, vector<1x128xf32>
    %24 = vector.broadcast %23 : vector<1x128xf32> to vector<16x128xf32>
    %25 = arith.mulf %22, %24 : vector<16x128xf32>
    %c0_9 = arith.constant 0 : index
    %c0_10 = arith.constant 0 : index
    %26 = vector.load %arg4[%c0_9, %c0_10] : memref<1x128xf32, #tpu.memory_space<vmem>>, vector<1x128xf32>
    %27 = vector.broadcast %26 : vector<1x128xf32> to vector<16x128xf32>
    %28 = arith.addf %25, %27 : vector<16x128xf32>
    %29 = arith.truncf %28 : vector<16x128xf32> to vector<16x128xbf16>
    %c0_11 = arith.constant 0 : index
    %c0_12 = arith.constant 0 : index
    %30 = vector.load %arg5[%c0_11, %c0_12] : memref<16x128xbf16, #tpu.memory_space<vmem>>, vector<16x128xbf16>
    tpu.vector_store %arg5[%c0_11, %c0_12], %29 {strides = array<i32>} : memref<16x128xbf16, #tpu.memory_space<vmem>>, vector<16x128xbf16>,
    return
  }
  func.func @transform_0(%arg0: i32) -> (i32, i32) {
    %c0_i32 = arith.constant 0 : i32
    %c0_i32_0 = arith.constant 0 : i32
    return %arg0, %c0_i32 : i32, i32
  }
  func.func @transform_1(%arg0: i32) -> (i32, i32) {
    %c0_i32 = arith.constant 0 : i32
    %c0_i32_0 = arith.constant 0 : i32
    return %arg0, %c0_i32 : i32, i32
  }
  func.func @transform_2(%arg0: i32) -> (i32, i32) {
    %c0_i32 = arith.constant 0 : i32
    %c0_i32_0 = arith.constant 0 : i32
    %c0_i32_1 = arith.constant 0 : i32
    return %c0_i32, %c0_i32_0 : i32, i32
  }
  func.func @transform_3(%arg0: i32) -> (i32, i32) {
    %c0_i32 = arith.constant 0 : i32
    %c0_i32_0 = arith.constant 0 : i32
    %c0_i32_1 = arith.constant 0 : i32
    return %c0_i32, %c0_i32_0 : i32, i32
  }
  func.func @transform_4(%arg0: i32) -> (i32, i32) {
    %c0_i32 = arith.constant 0 : i32
    %c0_i32_0 = arith.constant 0 : i32
    return %arg0, %c0_i32 : i32, i32
  }
}

module attributes {stable_mosaic.version = 11 : i64} {
  func.func @_matmul_kernel(%arg0: i32, %arg1: i32, %arg2: i32, %arg3: memref<16x128xbf16, #tpu.memory_space<vmem>>, %arg4: memref<128x256xbf16, #tpu.memory_space<vmem>>, %arg5: memref<1x256xf32, #tpu.memory_space<vmem>>, %arg6: memref<16x256xbf16, #tpu.memory_space<vmem>>, %arg7: memref<16x256xf32, #tpu.memory_space<vmem>>) attributes {dimension_semantics = [#tpu.dimension_semantics<parallel>, #tpu.dimension_semantics<parallel>, #tpu.dimension_semantics<arbitrary>], iteration_bounds = array<i64: 1, 1, 1>, scalar_prefetch = 0 : i64, scratch_operands = 1 : i64, tpu.core_type = #tpu.core_type<tc>, window_params = [{transform_indices = @transform_0, window_bounds = array<i64: 16, 128>}, {transform_indices = @transform_1, window_bounds = array<i64: 128, 256>}, {transform_indices = @transform_2, window_bounds = array<i64: 1, 256>}, {transform_indices = @transform_3, window_bounds = array<i64: 16, 256>}]} {
    %c0_i32 = arith.constant 0 : i32
    %0 = arith.cmpi eq, %arg2, %c0_i32 : i32
    %1 = arith.extui %0 : i1 to i32
    %c0_i32_0 = arith.constant 0 : i32
    %2 = arith.cmpi ne, %1, %c0_i32_0 : i32
    scf.if %2 {
      %cst_10 = arith.constant 0.000000e+00 : f32
      %12 = vector.broadcast %cst_10 : f32 to vector<16x256xf32>
      %c0_11 = arith.constant 0 : index
      %c0_12 = arith.constant 0 : index
      %13 = vector.load %arg7[%c0_11, %c0_12] : memref<16x256xf32, #tpu.memory_space<vmem>>, vector<16x256xf32>
      tpu.vector_store %arg7[%c0_11, %c0_12], %12 {strides = array<i32>} : memref<16x256xf32, #tpu.memory_space<vmem>>, vector<16x256xf32>,
    } else {
    }
    %c0 = arith.constant 0 : index
    %c0_1 = arith.constant 0 : index
    %3 = vector.load %arg7[%c0, %c0_1] : memref<16x256xf32, #tpu.memory_space<vmem>>, vector<16x256xf32>
    %c0_2 = arith.constant 0 : index
    %c0_3 = arith.constant 0 : index
    %4 = vector.load %arg3[%c0_2, %c0_3] : memref<16x128xbf16, #tpu.memory_space<vmem>>, vector<16x128xbf16>
    %c0_4 = arith.constant 0 : index
    %c0_5 = arith.constant 0 : index
    %5 = vector.load %arg4[%c0_4, %c0_5] : memref<128x256xbf16, #tpu.memory_space<vmem>>, vector<128x256xbf16>
    %cst = arith.constant dense<0.000000e+00> : vector<16x256xf32>
    %6 = tpu.matmul %4, %5, %cst {dimension_numbers = #tpu.dot_dimension_numbers<[1], [0], [0], [1], [0, 0, 1, 1], [], []>} : vector<16x128xbf16>, vector<128x256xbf16>, vector<16x256xf32> -> vector<16x256xf32>
    %7 = arith.addf %3, %6 : vector<16x256xf32>
    %c0_6 = arith.constant 0 : index
    %c0_7 = arith.constant 0 : index
    %8 = vector.load %arg7[%c0_6, %c0_7] : memref<16x256xf32, #tpu.memory_space<vmem>>, vector<16x256xf32>
    tpu.vector_store %arg7[%c0_6, %c0_7], %7 {strides = array<i32>} : memref<16x256xf32, #tpu.memory_space<vmem>>, vector<16x256xf32>,
    %c0_i32_8 = arith.constant 0 : i32
    %9 = arith.cmpi eq, %arg2, %c0_i32_8 : i32
    %10 = arith.extui %9 : i1 to i32
    %c0_i32_9 = arith.constant 0 : i32
    %11 = arith.cmpi ne, %10, %c0_i32_9 : i32
    scf.if %11 {
      %c0_10 = arith.constant 0 : index
      %c0_11 = arith.constant 0 : index
      %12 = vector.load %arg7[%c0_10, %c0_11] : memref<16x256xf32, #tpu.memory_space<vmem>>, vector<16x256xf32>
      %c0_12 = arith.constant 0 : index
      %c0_13 = arith.constant 0 : index
      %13 = vector.load %arg5[%c0_12, %c0_13] : memref<1x256xf32, #tpu.memory_space<vmem>>, vector<1x256xf32>
      %14 = vector.broadcast %13 : vector<1x256xf32> to vector<16x256xf32>
      %15 = arith.addf %12, %14 : vector<16x256xf32>
      %cst_14 = arith.constant 5.000000e-01 : f32
      %16 = vector.broadcast %cst_14 : f32 to vector<16x256xf32>
      %17 = arith.mulf %16, %15 : vector<16x256xf32>
      %cst_15 = arith.constant 0.707106769 : f32
      %18 = vector.broadcast %cst_15 : f32 to vector<16x256xf32>
      %19 = arith.mulf %15, %18 : vector<16x256xf32>
      %20 = math.erf %19 : vector<16x256xf32>
      %cst_16 = arith.constant 1.000000e+00 : f32
      %21 = vector.broadcast %cst_16 : f32 to vector<16x256xf32>
      %22 = arith.addf %21, %20 : vector<16x256xf32>
      %23 = arith.mulf %17, %22 : vector<16x256xf32>
      %24 = arith.truncf %23 : vector<16x256xf32> to vector<16x256xbf16>
      %c0_17 = arith.constant 0 : index
      %c0_18 = arith.constant 0 : index
      %25 = vector.load %arg6[%c0_17, %c0_18] : memref<16x256xbf16, #tpu.memory_space<vmem>>, vector<16x256xbf16>
      tpu.vector_store %arg6[%c0_17, %c0_18], %24 {strides = array<i32>} : memref<16x256xbf16, #tpu.memory_space<vmem>>, vector<16x256xbf16>,
    } else {
    }
    return
  }
  func.func @transform_0(%arg0: i32, %arg1: i32, %arg2: i32) -> (i32, i32) {
    %c0_i32 = arith.constant 0 : i32
    return %arg0, %arg2 : i32, i32
  }
  func.func @transform_1(%arg0: i32, %arg1: i32, %arg2: i32) -> (i32, i32) {
    %c0_i32 = arith.constant 0 : i32
    return %arg2, %arg1 : i32, i32
  }
  func.func @transform_2(%arg0: i32, %arg1: i32, %arg2: i32) -> (i32, i32) {
    %c0_i32 = arith.constant 0 : i32
    %c0_i32_0 = arith.constant 0 : i32
    return %c0_i32, %arg1 : i32, i32
  }
  func.func @transform_3(%arg0: i32, %arg1: i32, %arg2: i32) -> (i32, i32) {
    %c0_i32 = arith.constant 0 : i32
    return %arg0, %arg1 : i32, i32
  }
}

module attributes {stable_mosaic.version = 11 : i64} {
  func.func @_matmul_kernel(%arg0: i32, %arg1: i32, %arg2: i32, %arg3: memref<16x256xbf16, #tpu.memory_space<vmem>>, %arg4: memref<256x128xbf16, #tpu.memory_space<vmem>>, %arg5: memref<1x128xf32, #tpu.memory_space<vmem>>, %arg6: memref<16x128xbf16, #tpu.memory_space<vmem>>, %arg7: memref<16x128xf32, #tpu.memory_space<vmem>>) attributes {dimension_semantics = [#tpu.dimension_semantics<parallel>, #tpu.dimension_semantics<parallel>, #tpu.dimension_semantics<arbitrary>], iteration_bounds = array<i64: 1, 1, 1>, scalar_prefetch = 0 : i64, scratch_operands = 1 : i64, tpu.core_type = #tpu.core_type<tc>, window_params = [{transform_indices = @transform_0, window_bounds = array<i64: 16, 256>}, {transform_indices = @transform_1, window_bounds = array<i64: 256, 128>}, {transform_indices = @transform_2, window_bounds = array<i64: 1, 128>}, {transform_indices = @transform_3, window_bounds = array<i64: 16, 128>}]} {
    %c0_i32 = arith.constant 0 : i32
    %0 = arith.cmpi eq, %arg2, %c0_i32 : i32
    %1 = arith.extui %0 : i1 to i32
    %c0_i32_0 = arith.constant 0 : i32
    %2 = arith.cmpi ne, %1, %c0_i32_0 : i32
    scf.if %2 {
      %cst_10 = arith.constant 0.000000e+00 : f32
      %12 = vector.broadcast %cst_10 : f32 to vector<16x128xf32>
      %c0_11 = arith.constant 0 : index
      %c0_12 = arith.constant 0 : index
      %13 = vector.load %arg7[%c0_11, %c0_12] : memref<16x128xf32, #tpu.memory_space<vmem>>, vector<16x128xf32>
      tpu.vector_store %arg7[%c0_11, %c0_12], %12 {strides = array<i32>} : memref<16x128xf32, #tpu.memory_space<vmem>>, vector<16x128xf32>,
    } else {
    }
    %c0 = arith.constant 0 : index
    %c0_1 = arith.constant 0 : index
    %3 = vector.load %arg7[%c0, %c0_1] : memref<16x128xf32, #tpu.memory_space<vmem>>, vector<16x128xf32>
    %c0_2 = arith.constant 0 : index
    %c0_3 = arith.constant 0 : index
    %4 = vector.load %arg3[%c0_2, %c0_3] : memref<16x256xbf16, #tpu.memory_space<vmem>>, vector<16x256xbf16>
    %c0_4 = arith.constant 0 : index
    %c0_5 = arith.constant 0 : index
    %5 = vector.load %arg4[%c0_4, %c0_5] : memref<256x128xbf16, #tpu.memory_space<vmem>>, vector<256x128xbf16>
    %cst = arith.constant dense<0.000000e+00> : vector<16x128xf32>
    %6 = tpu.matmul %4, %5, %cst {dimension_numbers = #tpu.dot_dimension_numbers<[1], [0], [0], [1], [0, 0, 1, 1], [], []>} : vector<16x256xbf16>, vector<256x128xbf16>, vector<16x128xf32> -> vector<16x128xf32>
    %7 = arith.addf %3, %6 : vector<16x128xf32>
    %c0_6 = arith.constant 0 : index
    %c0_7 = arith.constant 0 : index
    %8 = vector.load %arg7[%c0_6, %c0_7] : memref<16x128xf32, #tpu.memory_space<vmem>>, vector<16x128xf32>
    tpu.vector_store %arg7[%c0_6, %c0_7], %7 {strides = array<i32>} : memref<16x128xf32, #tpu.memory_space<vmem>>, vector<16x128xf32>,
    %c0_i32_8 = arith.constant 0 : i32
    %9 = arith.cmpi eq, %arg2, %c0_i32_8 : i32
    %10 = arith.extui %9 : i1 to i32
    %c0_i32_9 = arith.constant 0 : i32
    %11 = arith.cmpi ne, %10, %c0_i32_9 : i32
    scf.if %11 {
      %c0_10 = arith.constant 0 : index
      %c0_11 = arith.constant 0 : index
      %12 = vector.load %arg7[%c0_10, %c0_11] : memref<16x128xf32, #tpu.memory_space<vmem>>, vector<16x128xf32>
      %c0_12 = arith.constant 0 : index
      %c0_13 = arith.constant 0 : index
      %13 = vector.load %arg5[%c0_12, %c0_13] : memref<1x128xf32, #tpu.memory_space<vmem>>, vector<1x128xf32>
      %14 = vector.broadcast %13 : vector<1x128xf32> to vector<16x128xf32>
      %15 = arith.addf %12, %14 : vector<16x128xf32>
      %16 = arith.truncf %15 : vector<16x128xf32> to vector<16x128xbf16>
      %c0_14 = arith.constant 0 : index
      %c0_15 = arith.constant 0 : index
      %17 = vector.load %arg6[%c0_14, %c0_15] : memref<16x128xbf16, #tpu.memory_space<vmem>>, vector<16x128xbf16>
      tpu.vector_store %arg6[%c0_14, %c0_15], %16 {strides = array<i32>} : memref<16x128xbf16, #tpu.memory_space<vmem>>, vector<16x128xbf16>,
    } else {
    }
    return
  }
  func.func @transform_0(%arg0: i32, %arg1: i32, %arg2: i32) -> (i32, i32) {
    %c0_i32 = arith.constant 0 : i32
    return %arg0, %arg2 : i32, i32
  }
  func.func @transform_1(%arg0: i32, %arg1: i32, %arg2: i32) -> (i32, i32) {
    %c0_i32 = arith.constant 0 : i32
    return %arg2, %arg1 : i32, i32
  }
  func.func @transform_2(%arg0: i32, %arg1: i32, %arg2: i32) -> (i32, i32) {
    %c0_i32 = arith.constant 0 : i32
    %c0_i32_0 = arith.constant 0 : i32
    return %c0_i32, %arg1 : i32, i32
  }
  func.func @transform_3(%arg0: i32, %arg1: i32, %arg2: i32) -> (i32, i32) {
    %c0_i32 = arith.constant 0 : i32
    return %arg0, %arg1 : i32, i32
  }
}

module attributes {stable_mosaic.version = 11 : i64} {
  func.func @_pooler_fc_kernel(%arg0: i32, %arg1: memref<2x128xbf16, #tpu.memory_space<vmem>>, %arg2: memref<128x128xbf16, #tpu.memory_space<vmem>>, %arg3: memref<1x128xf32, #tpu.memory_space<vmem>>, %arg4: memref<128x128xbf16, #tpu.memory_space<vmem>>, %arg5: memref<1x128xf32, #tpu.memory_space<vmem>>, %arg6: memref<2x128xf32, #tpu.memory_space<vmem>>) attributes {dimension_semantics = [#tpu.dimension_semantics<arbitrary>], iteration_bounds = array<i64: 1>, scalar_prefetch = 0 : i64, scratch_operands = 0 : i64, tpu.core_type = #tpu.core_type<tc>, window_params = [{pipeline_mode = #tpu.pipeline_mode<synchronous>, transform_indices = @transform_0, window_bounds = array<i64: 2, 128>}, {pipeline_mode = #tpu.pipeline_mode<synchronous>, transform_indices = @transform_1, window_bounds = array<i64: 128, 128>}, {pipeline_mode = #tpu.pipeline_mode<synchronous>, transform_indices = @transform_2, window_bounds = array<i64: 1, 128>}, {pipeline_mode = #tpu.pipeline_mode<synchronous>, transform_indices = @transform_3, window_bounds = array<i64: 128, 128>}, {pipeline_mode = #tpu.pipeline_mode<synchronous>, transform_indices = @transform_4, window_bounds = array<i64: 1, 128>}, {pipeline_mode = #tpu.pipeline_mode<synchronous>, transform_indices = @transform_5, window_bounds = array<i64: 2, 128>}]} {
    %c0 = arith.constant 0 : index
    %c0_0 = arith.constant 0 : index
    %0 = vector.load %arg1[%c0, %c0_0] : memref<2x128xbf16, #tpu.memory_space<vmem>>, vector<2x128xbf16>
    %c0_1 = arith.constant 0 : index
    %c0_2 = arith.constant 0 : index
    %1 = vector.load %arg2[%c0_1, %c0_2] : memref<128x128xbf16, #tpu.memory_space<vmem>>, vector<128x128xbf16>
    %cst = arith.constant dense<0.000000e+00> : vector<2x128xf32>
    %2 = tpu.matmul %0, %1, %cst {dimension_numbers = #tpu.dot_dimension_numbers<[1], [0], [0], [1], [0, 0, 1, 1], [], []>} : vector<2x128xbf16>, vector<128x128xbf16>, vector<2x128xf32> -> vector<2x128xf32>
    %c0_3 = arith.constant 0 : index
    %c0_4 = arith.constant 0 : index
    %3 = vector.load %arg3[%c0_3, %c0_4] : memref<1x128xf32, #tpu.memory_space<vmem>>, vector<1x128xf32>
    %4 = vector.broadcast %3 : vector<1x128xf32> to vector<2x128xf32>
    %5 = arith.addf %2, %4 : vector<2x128xf32>
    %6 = math.tanh %5 : vector<2x128xf32>
    %7 = arith.truncf %6 : vector<2x128xf32> to vector<2x128xbf16>
    %c0_5 = arith.constant 0 : index
    %c0_6 = arith.constant 0 : index
    %8 = vector.load %arg4[%c0_5, %c0_6] : memref<128x128xbf16, #tpu.memory_space<vmem>>, vector<128x128xbf16>
    %cst_7 = arith.constant dense<0.000000e+00> : vector<2x128xf32>
    %9 = tpu.matmul %7, %8, %cst_7 {dimension_numbers = #tpu.dot_dimension_numbers<[1], [0], [0], [1], [0, 0, 1, 1], [], []>} : vector<2x128xbf16>, vector<128x128xbf16>, vector<2x128xf32> -> vector<2x128xf32>
    %c0_8 = arith.constant 0 : index
    %c0_9 = arith.constant 0 : index
    %10 = vector.load %arg5[%c0_8, %c0_9] : memref<1x128xf32, #tpu.memory_space<vmem>>, vector<1x128xf32>
    %11 = vector.broadcast %10 : vector<1x128xf32> to vector<2x128xf32>
    %12 = arith.addf %9, %11 : vector<2x128xf32>
    %c0_10 = arith.constant 0 : index
    %c0_11 = arith.constant 0 : index
    %13 = vector.load %arg6[%c0_10, %c0_11] : memref<2x128xf32, #tpu.memory_space<vmem>>, vector<2x128xf32>
    tpu.vector_store %arg6[%c0_10, %c0_11], %12 {strides = array<i32>} : memref<2x128xf32, #tpu.memory_space<vmem>>, vector<2x128xf32>,
    return
  }
  func.func @transform_0(%arg0: i32) -> (i32, i32) {
    %c0_i32 = arith.constant 0 : i32
    %c0_i32_0 = arith.constant 0 : i32
    %c0_i32_1 = arith.constant 0 : i32
    return %c0_i32, %c0_i32_0 : i32, i32
  }
  func.func @transform_1(%arg0: i32) -> (i32, i32) {
    %c0_i32 = arith.constant 0 : i32
    %c0_i32_0 = arith.constant 0 : i32
    %c0_i32_1 = arith.constant 0 : i32
    return %c0_i32, %c0_i32_0 : i32, i32
  }
  func.func @transform_2(%arg0: i32) -> (i32, i32) {
    %c0_i32 = arith.constant 0 : i32
    %c0_i32_0 = arith.constant 0 : i32
    %c0_i32_1 = arith.constant 0 : i32
    return %c0_i32, %c0_i32_0 : i32, i32
  }
  func.func @transform_3(%arg0: i32) -> (i32, i32) {
    %c0_i32 = arith.constant 0 : i32
    %c0_i32_0 = arith.constant 0 : i32
    %c0_i32_1 = arith.constant 0 : i32
    return %c0_i32, %c0_i32_0 : i32, i32
  }
  func.func @transform_4(%arg0: i32) -> (i32, i32) {
    %c0_i32 = arith.constant 0 : i32
    %c0_i32_0 = arith.constant 0 : i32
    %c0_i32_1 = arith.constant 0 : i32
    return %c0_i32, %c0_i32_0 : i32, i32
  }
  func.func @transform_5(%arg0: i32) -> (i32, i32) {
    %c0_i32 = arith.constant 0 : i32
    %c0_i32_0 = arith.constant 0 : i32
    %c0_i32_1 = arith.constant 0 : i32
    return %c0_i32, %c0_i32_0 : i32, i32
  }
}

</mosaic_0001>

<llo_original>
// kernel: _lambda_.16
$region0: #{_lambda_.16}
  #allocation0 [shape = 'u32[]', space=smem, size = 0x4, offset = 0x4, fixed_abs, tag = 'smem constant byte address 0x4 - core index']
  #allocation1 [shape = 'u32[72,128]{1,0:T(1,128)}', space=vmem, size = 0x9000, scoped, tag = 'internal scratch']
  %s0 = inlined_call_operand.vmem [shape: bf16[16,128], index: 0, kind: input, shape index: {}]
  %s1 = inlined_call_operand.vmem [shape: f32[1,128], index: 1, kind: input, shape index: {}]
  %s2 = inlined_call_operand.vmem [shape: f32[1,128], index: 2, kind: input, shape index: {}]
  %s3 = inlined_call_operand.vmem [shape: bf16[16,128], index: 3, kind: output, shape index: {}]
  %s4 = sld [smem:[#allocation0]]
  $region22: #{_lambda_.16} parent=0
    _
  %s6 = ssub.s32 1, %s4
  %s7 = scalar_select 0, %s6, %s4
  // Predicated region
  $region2: #{_lambda_.16} parent=0 // pred_check
    _
  $region3: #{_lambda_.16} parent=0 // pred_check_branch
    %9 = sbr.rel (0) target = $region5
  $region4: #{_lambda_.16} parent=0 // pred_region
    _
  $region5: #{_lambda_.16} parent=0 // pred_fallthru
    _
  // Predicated region
  $region6: #{_lambda_.16} parent=0 // pred_check
    _
  $region7: #{_lambda_.16} parent=0 // pred_check_branch
    %11 = sbr.rel (0) target = $region9
  $region8: #{_lambda_.16} parent=0 // pred_region
    _
  $region9: #{_lambda_.16} parent=0 // pred_fallthru
    _
  // Predicated region
  $region10: #{_lambda_.16} parent=0 // pred_check
    _
  $region11: #{_lambda_.16} parent=0 // pred_check_branch
    %13 = sbr.rel (0) target = $region13
  $region12: #{_lambda_.16} parent=0 // pred_region
    _
  $region13: #{_lambda_.16} parent=0 // pred_fallthru
    _
  %v14 = vld [vmem:[%s0] sm:$0xf]
  %v15 = vld [vmem:[%s0 + $0x4] sm:$0xf]
  %v16 = vunpack.c.l.bf16 %v14
  %v17 = vunpack.c.l.bf16 %v15
  %18 = vadd.xlane.f32.xlu0 %v16
  %v19 = vpop.xlane.xlu0 %18
  %20 = vadd.xlane.f32.xlu0 %v17
  %v21 = vpop.xlane.xlu0 %20
  %v22 = vrcp.pop 128.0
  %v23 = vmul.f32 128.0, %v22
  %v24 = vsub.f32 1.0, %v23
  %v25 = vmul.f32 %v22, %v24
  %v26 = vadd.f32 %v22, %v25
  %vm27 = vweird.f32 %v22
  %v28 = vsel %vm27, %v22, %v26
  %v29 = vmul.f32 %v19, %v28
  %v30 = vmul.f32 %v21, %v28
  %v31 = vsub.f32 %v16, %v29
  %v32 = vsub.f32 %v17, %v30
  %v33 = vmul.f32 %v31, %v31
  %v34 = vmul.f32 %v32, %v32
  %35 = vadd.xlane.f32.xlu0 %v33
  %v36 = vpop.xlane.xlu0 %35
  %37 = vadd.xlane.f32.xlu0 %v34
  %v38 = vpop.xlane.xlu0 %37
  %v39 = vmul.f32 %v36, %v28
  %v40 = vmul.f32 %v38, %v28
  %v41 = vadd.f32 %v39, 1e-05
  %v42 = vadd.f32 %v40, 1e-05
  %v43 = vrsqrt.pop %v41
  %v44 = vmul.f32 %v43, %v41
  %v45 = vmul.f32 %v44, %v43
  %v46 = vmul.f32 0.5, %v45
  %v47 = vsub.f32 1.5, %v46
  %v48 = vmul.f32 %v43, %v47
  %vm49 = vweird.f32 %v41
  %vm50 = vweird.f32 %v43
  %vm51 = vmor %vm49, %vm50
  %v52 = vsel %vm51, %v43, %v48
  %v53 = vrsqrt.pop %v42
  %v54 = vmul.f32 %v53, %v42
  %v55 = vmul.f32 %v54, %v53
  %v56 = vmul.f32 0.5, %v55
  %v57 = vsub.f32 1.5, %v56
  %v58 = vmul.f32 %v53, %v57
  %vm59 = vweird.f32 %v42
  %vm60 = vweird.f32 %v53
  %vm61 = vmor %vm59, %vm60
  %v62 = vsel %vm61, %v53, %v58
  %v63 = vmul.f32 %v31, %v52
  %v64 = vmul.f32 %v32, %v62
  %v65 = vld [vmem:[%s1] sm:$0x1]
  %v67 = vperm.slane %v65, 0
  %v69 = vmul.f32 %v63, %v67
  %v70 = vmul.f32 %v64, %v67
  %v71 = vld [vmem:[%s2] sm:$0x1]
  %v73 = vperm.slane %v71, 0
  %v75 = vadd.f32 %v69, %v73
  %v76 = vadd.f32 %v70, %v73
  %v77 = vpack.c.bf16 %v75, %v75
  %v78 = vpack.c.bf16 %v76, %v76
  %79 = vst [vmem:[%s3] sm:$0xf] %v77
  %80 = vst [vmem:[%s3 + $0x4] sm:$0xf] %v78
  // Predicated region
  $region14: #{_lambda_.16} parent=0 // pred_check
    _
  $region15: #{_lambda_.16} parent=0 // pred_check_branch
    %82 = sbr.rel (0) target = $region17
  $region16: #{_lambda_.16} parent=0 // pred_region
    _
  $region17: #{_lambda_.16} parent=0 // pred_fallthru
    _
  // Predicated region
  $region18: #{_lambda_.16} parent=0 // pred_check
    _
  $region19: #{_lambda_.16} parent=0 // pred_check_branch
    %84 = sbr.rel (0) target = $region21
  $region20: #{_lambda_.16} parent=0 // pred_region
    _
  $region21: #{_lambda_.16} parent=0 // pred_fallthru
    _

// kernel: _lambda_.19
$region0: #{_lambda_.19}
  #allocation0 [shape = 'u32[]', space=smem, size = 0x4, offset = 0x4, fixed_abs, tag = 'smem constant byte address 0x4 - core index']
  #allocation1 [shape = 'u32[72,128]{1,0:T(1,128)}', space=vmem, size = 0x9000, scoped, tag = 'internal scratch']
  #allocation2 [shape = 'f32[16,128]{1,0:T(8,128)}', space=vmem, size = 0x2000, scoped, tag = 'scratch operand']
  %s0 = inlined_call_operand.vmem [shape: bf16[16,128], index: 0, kind: input, shape index: {}]
  %s1 = inlined_call_operand.vmem [shape: bf16[128,128], index: 1, kind: input, shape index: {}]
  %s2 = inlined_call_operand.vmem [shape: f32[1,128], index: 2, kind: input, shape index: {}]
  %s3 = inlined_call_operand.vmem [shape: bf16[16,128], index: 3, kind: output, shape index: {}]
  %s4 = sld [smem:[#allocation0]]
  $region30: #{_lambda_.19} parent=0
    _
  %s6 = ssub.s32 1, %s4
  %s7 = scalar_select 0, %s6, %s4
  // Predicated region
  $region2: #{_lambda_.19} parent=0 // pred_check
    _
  $region3: #{_lambda_.19} parent=0 // pred_check_branch
    %9 = sbr.rel (0) target = $region5
  $region4: #{_lambda_.19} parent=0 // pred_region
    _
  $region5: #{_lambda_.19} parent=0 // pred_fallthru
    _
  // Predicated region
  $region6: #{_lambda_.19} parent=0 // pred_check
    _
  $region7: #{_lambda_.19} parent=0 // pred_check_branch
    %11 = sbr.rel (0) target = $region9
  $region8: #{_lambda_.19} parent=0 // pred_region
    _
  $region9: #{_lambda_.19} parent=0 // pred_fallthru
    _
  // Predicated region
  $region10: #{_lambda_.19} parent=0 // pred_check
    _
  $region11: #{_lambda_.19} parent=0 // pred_check_branch
    %13 = sbr.rel (0) target = $region13
  $region12: #{_lambda_.19} parent=0 // pred_region
    _
  $region13: #{_lambda_.19} parent=0 // pred_fallthru
    _
  %p14 = scmp.eq.s32.totalorder 0, 0
  // Predicated region
  $region14: #{_lambda_.19} parent=0 // pred_check
    %p15 = pneg %p14
  $region15: #{_lambda_.19} parent=0 // pred_check_branch
    %17 = sbr.rel (%p15) target = $region17
  $region16: #{_lambda_.19} parent=0 // pred_region
    %18 = vst [vmem:[#allocation2] sm:$0xff] 0.0
    %19 = vst [vmem:[#allocation2 + $0x8] sm:$0xff] 0.0
  $region17: #{_lambda_.19} parent=0 // pred_fallthru
    _
  %v20 = vld [vmem:[#allocation2] sm:$0xff]
  %v21 = vld [vmem:[#allocation2 + $0x8] sm:$0xff]
  %v22 = vld [vmem:[%s0] sm:$0xf]
  %v23 = vld [vmem:[%s0 + $0x4] sm:$0xf]
  %v24 = vld [vmem:[%s1] sm:$0xf]
  %v25 = vld [vmem:[%s1 + $0x4] sm:$0xf]
  %v26 = vld [vmem:[%s1 + $0x8] sm:$0xf]
  %v27 = vld [vmem:[%s1 + $0xc] sm:$0xf]
  %v28 = vld [vmem:[%s1 + $0x10] sm:$0xf]
  %v29 = vld [vmem:[%s1 + $0x14] sm:$0xf]
  %v30 = vld [vmem:[%s1 + $0x18] sm:$0xf]
  %v31 = vld [vmem:[%s1 + $0x1c] sm:$0xf]
  %v32 = vld [vmem:[%s1 + $0x20] sm:$0xf]
  %v33 = vld [vmem:[%s1 + $0x24] sm:$0xf]
  %v34 = vld [vmem:[%s1 + $0x28] sm:$0xf]
  %v35 = vld [vmem:[%s1 + $0x2c] sm:$0xf]
  %v36 = vld [vmem:[%s1 + $0x30] sm:$0xf]
  %v37 = vld [vmem:[%s1 + $0x34] sm:$0xf]
  %v38 = vld [vmem:[%s1 + $0x38] sm:$0xf]
  %v39 = vld [vmem:[%s1 + $0x3c] sm:$0xf]
  %v42 = vunpack.c.l.b16 %v22
  %v43 = vunpack.c.l.b16 %v23
  %v44 = vpack.c.b16 %v43, %v42
  %v62 = vunpack.c.l.b16 %v24
  %v63 = vunpack.c.l.b16 %v25
  %v64 = vunpack.c.l.b16 %v26
  %v65 = vunpack.c.l.b16 %v27
  %v66 = vunpack.c.l.b16 %v28
  %v67 = vunpack.c.l.b16 %v29
  %v68 = vunpack.c.l.b16 %v30
  %v69 = vunpack.c.l.b16 %v31
  %v70 = vunpack.c.l.b16 %v32
  %v71 = vunpack.c.l.b16 %v33
  %v72 = vunpack.c.l.b16 %v34
  %v73 = vunpack.c.l.b16 %v35
  %v74 = vunpack.c.l.b16 %v36
  %v75 = vunpack.c.l.b16 %v37
  %v76 = vunpack.c.l.b16 %v38
  %v77 = vunpack.c.l.b16 %v39
  %v78 = vpack.c.b16 %v63, %v62
  %v79 = vpack.c.b16 %v65, %v64
  %v80 = vpack.c.b16 %v67, %v66
  %v81 = vpack.c.b16 %v69, %v68
  %v82 = vpack.c.b16 %v71, %v70
  %v83 = vpack.c.b16 %v73, %v72
  %v84 = vpack.c.b16 %v75, %v74
  %v85 = vpack.c.b16 %v77, %v76
  %94 = vmatpush.bf16.msra.mxu0 %v85
  %95 = vmatpush.bf16.msra.mxu0 %v84
  %96 = vmatpush.bf16.msra.mxu0 %v83
  %97 = vmatpush.bf16.msra.mxu0 %v82
  %98 = vmatpush.bf16.msra.mxu0 %v81
  %99 = vmatpush.bf16.msra.mxu0 %v80
  %100 = vmatpush.bf16.msra.mxu0 %v79
  %101 = vmatpush.bf16.msra.mxu0 %v78
  %102 = vmatmul.bf16.gmra.mxu0 %v44
  %v103 = vpop.f32.mrf.mxu0
  %v104 = vadd.f32 0.0, %v103
  %v105 = vpop.f32.mrf.mxu0
  %v106 = vadd.f32 0.0, %v105
  %107 = vdwg.mxu0
  %v108 = vadd.f32 %v20, %v104
  %v109 = vadd.f32 %v21, %v106
  %110 = vst [vmem:[#allocation2] sm:$0xff] %v108
  %111 = vst [vmem:[#allocation2 + $0x8] sm:$0xff] %v109
  // Predicated region
  $region18: #{_lambda_.19} parent=0 // pred_check
    %p112 = pneg %p14
  $region19: #{_lambda_.19} parent=0 // pred_check_branch
    %114 = sbr.rel (%p112) target = $region21
  $region20: #{_lambda_.19} parent=0 // pred_region
    %v115 = vld [vmem:[#allocation2] sm:$0xff]
    %v116 = vld [vmem:[#allocation2 + $0x8] sm:$0xff]
    %v117 = vld [vmem:[%s2] sm:$0x1]
    %v119 = vperm.slane %v117, 0
    %v121 = vadd.f32 %v115, %v119
    %v122 = vadd.f32 %v116, %v119
    %v123 = vpack.c.bf16 %v121, %v121
    %v124 = vpack.c.bf16 %v122, %v122
    %125 = vst [vmem:[%s3] sm:$0xf] %v123
    %126 = vst [vmem:[%s3 + $0x4] sm:$0xf] %v124
  $region21: #{_lambda_.19} parent=0 // pred_fallthru
    _
  // Predicated region
  $region22: #{_lambda_.19} parent=0 // pred_check
    _
  $region23: #{_lambda_.19} parent=0 // pred_check_branch
    %128 = sbr.rel (0) target = $region25
  $region24: #{_lambda_.19} parent=0 // pred_region
    _
  $region25: #{_lambda_.19} parent=0 // pred_fallthru
    _
  // Predicated region
  $region26: #{_lambda_.19} parent=0 // pred_check
    _
  $region27: #{_lambda_.19} parent=0 // pred_check_branch
    %130 = sbr.rel (0) target = $region29
  $region28: #{_lambda_.19} parent=0 // pred_region
    _
  $region29: #{_lambda_.19} parent=0 // pred_fallthru
    _

// kernel: _lambda_.17
$region0: #{_lambda_.17}
  #allocation0 [shape = 'u32[]', space=smem, size = 0x4, offset = 0x4, fixed_abs, tag = 'smem constant byte address 0x4 - core index']
  #allocation1 [shape = 'u32[72,128]{1,0:T(1,128)}', space=vmem, size = 0x9000, scoped, tag = 'internal scratch']
  #allocation2 [shape = 'f32[16,128]{1,0:T(8,128)}', space=vmem, size = 0x2000, scoped, tag = 'scratch operand']
  %s0 = inlined_call_operand.vmem [shape: bf16[16,128], index: 0, kind: input, shape index: {}]
  %s1 = inlined_call_operand.vmem [shape: bf16[128,384], index: 1, kind: input, shape index: {}]
  %s2 = inlined_call_operand.vmem [shape: f32[1,384], index: 2, kind: input, shape index: {}]
  %s3 = inlined_call_operand.vmem [shape: bf16[16,384], index: 3, kind: output, shape index: {}]
  %s4 = sld [smem:[#allocation0]]
  $region131: #{_lambda_.17} parent=0
    _
  %s6 = ssub.s32 1, %s4
  %s7 = scalar_select 0, %s6, %s4
  $region1: #{_lambda_.17} parent=0
    #allocation3 [shape = 'u8[65536]{0}', space=vmem, size = 0x10000, scoped, tag = 'input window, operand 1']
    #allocation4 [shape = 'u8[8192]{0}', space=vmem, size = 0x2000, scoped, tag = 'output window, operand 0']
    loop: start=0, step=1, limit=5
    $region2: #{_lambda_.17} parent=1 // loop_pre_header
      _
    $region3: #{_lambda_.17} parent=1 // loop_header
      %s9 = sphi 0, %s13
      %p10 = scmp.ge.s32.totalorder %s9, 5
      %s16 = sphi 0, %s35
      %s17 = sphi 0, %s31
      %s18 = sphi 0, %s27
      %s19 = sphi 0, %s16
      %s20 = sphi 0, %s17
      %s21 = sphi 0, %s18
      %s22 = sphi 0, %s19
      %s23 = sphi 0, %s20
      %s24 = sphi 0, %s21
      %s40 = sphi 0, %s42
      %s43 = sphi 0, %s40
      %s44 = sphi 0, %s43
      %s60 = sphi 0, %s44
      %s68 = sphi 0, %s70
      %s71 = sphi 0, %s68
      %s72 = sphi 0, %s71
      %s88 = sphi 0, %s72
      %s94 = sphi 0, %s96
      %s97 = sphi 0, %s94
      %s98 = sphi 0, %s97
      %s114 = sphi 0, %s98
      %s122 = sphi 0, %s124
      %s125 = sphi 0, %s122
      %s126 = sphi 0, %s125
      %s142 = sphi 0, %s126
    $region4: #{_lambda_.17} parent=1 // loop_header_branch
      %12 = sbr.rel (%p10) target = $region8
    $region5: #{_lambda_.17} parent=1 // loop_body
      %s14 = ssub.s32 %s9, 1
      %s15 = ssub.s32 %s9, 2
      %s25 = sadd.s32 1, %s18
      %p26 = scmp.ge.s32.totalorder %s25, 1
      %s27 = scalar_select %p26, 0, %s25
      %s28 = sadd.s32 1, %s17
      %s29 = scalar_select %p26, %s28, %s17
      %p30 = scmp.ge.s32.totalorder %s29, 3
      %s31 = scalar_select %p30, 0, %s29
      %s32 = sadd.s32 1, %s16
      %s33 = scalar_select %p30, %s32, %s16
      %p34 = scmp.ge.s32.totalorder %s33, 1
      %s35 = scalar_select %p34, 0, %s33
      %s36 = ssub.s32 %s16, %s35
      %s37 = ssub.s32 %s18, %s27
      %s38 = sor.u32 %s36, %s37
      %p39 = scmp.eq.s32.totalorder %s38, 0
      %s41 = sadd.s32 %s40, 1
      %s42 = scalar_select %p39, %s40, %s41
      %p45 = pneg %p39
      %p46 = scmp.eq.s32.totalorder %s9, 2
      %p47 = por %p45, %p46
      %p48 = scmp.ne.s32.totalorder %s40, %s43
      %p49 = scmp.eq.s32.totalorder %s9, 0
      %p50 = por %p48, %p49
      %p51 = scmp.ne.s32.totalorder %s40, %s43
      %p52 = scmp.eq.s32.totalorder %s14, 2
      %p53 = por %p51, %p52
      %p54 = scmp.ne.s32.totalorder %s43, %s44
      %p55 = scmp.eq.s32.totalorder %s14, 0
      %p56 = por %p54, %p55
      %p57 = scmp.ne.s32.totalorder %s43, %s44
      %p58 = scmp.eq.s32.totalorder %s15, 2
      %p59 = por %p57, %p58
      %p61 = scmp.ne.s32.totalorder %s44, %s60
      %p62 = scmp.eq.s32.totalorder %s15, 0
      %p63 = por %p61, %p62
      %s64 = ssub.s32 %s18, %s27
      %s65 = ssub.s32 %s17, %s31
      %s66 = sor.u32 %s64, %s65
      %p67 = scmp.eq.s32.totalorder %s66, 0
      %s69 = sadd.s32 %s68, 1
      %s70 = scalar_select %p67, %s68, %s69
      %p73 = pneg %p67
      %p74 = scmp.eq.s32.totalorder %s9, 2
      %p75 = por %p73, %p74
      %p76 = scmp.ne.s32.totalorder %s68, %s71
      %p77 = scmp.eq.s32.totalorder %s9, 0
      %p78 = por %p76, %p77
      %p79 = scmp.ne.s32.totalorder %s68, %s71
      %p80 = scmp.eq.s32.totalorder %s14, 2
      %p81 = por %p79, %p80
      %p82 = scmp.ne.s32.totalorder %s71, %s72
      %p83 = scmp.eq.s32.totalorder %s14, 0
      %p84 = por %p82, %p83
      %p85 = scmp.ne.s32.totalorder %s71, %s72
      %p86 = scmp.eq.s32.totalorder %s15, 2
      %p87 = por %p85, %p86
      %p89 = scmp.ne.s32.totalorder %s72, %s88
      %p90 = scmp.eq.s32.totalorder %s15, 0
      %p91 = por %p89, %p90
      %s92 = ssub.s32 %s17, %s31
      %p93 = scmp.eq.s32.totalorder %s92, 0
      %s95 = sadd.s32 %s94, 1
      %s96 = scalar_select %p93, %s94, %s95
      %p99 = pneg %p93
      %p100 = scmp.eq.s32.totalorder %s9, 2
      %p101 = por %p99, %p100
      %p102 = scmp.ne.s32.totalorder %s94, %s97
      %p103 = scmp.eq.s32.totalorder %s9, 0
      %p104 = por %p102, %p103
      %p105 = scmp.ne.s32.totalorder %s94, %s97
      %p106 = scmp.eq.s32.totalorder %s14, 2
      %p107 = por %p105, %p106
      %p108 = scmp.ne.s32.totalorder %s97, %s98
      %p109 = scmp.eq.s32.totalorder %s14, 0
      %p110 = por %p108, %p109
      %p111 = scmp.ne.s32.totalorder %s97, %s98
      %p112 = scmp.eq.s32.totalorder %s15, 2
      %p113 = por %p111, %p112
      %p115 = scmp.ne.s32.totalorder %s98, %s114
      %p116 = scmp.eq.s32.totalorder %s15, 0
      %p117 = por %p115, %p116
      %s118 = ssub.s32 %s16, %s35
      %s119 = ssub.s32 %s17, %s31
      %s120 = sor.u32 %s118, %s119
      %p121 = scmp.eq.s32.totalorder %s120, 0
      %s123 = sadd.s32 %s122, 1
      %s124 = scalar_select %p121, %s122, %s123
      %p127 = pneg %p121
      %p128 = scmp.eq.s32.totalorder %s9, 2
      %p129 = por %p127, %p128
      %p130 = scmp.ne.s32.totalorder %s122, %s125
      %p131 = scmp.eq.s32.totalorder %s9, 0
      %p132 = por %p130, %p131
      %p133 = scmp.ne.s32.totalorder %s122, %s125
      %p134 = scmp.eq.s32.totalorder %s14, 2
      %p135 = por %p133, %p134
      %p136 = scmp.ne.s32.totalorder %s125, %s126
      %p137 = scmp.eq.s32.totalorder %s14, 0
      %p138 = por %p136, %p137
      %p139 = scmp.ne.s32.totalorder %s125, %s126
      %p140 = scmp.eq.s32.totalorder %s15, 2
      %p141 = por %p139, %p140
      %p143 = scmp.ne.s32.totalorder %s126, %s142
      %p144 = scmp.eq.s32.totalorder %s15, 0
      %p145 = por %p143, %p144
      %p146 = scmp.le.s32.totalorder 1, %s9
      %p147 = scmp.lt.s32.totalorder %s9, 4
      %p148 = pnand %p146, %p147
      %p149 = pneg %p148
      // Predicated region
      $region9: #{_lambda_.17} parent=5 // pred_check
        _
      $region10: #{_lambda_.17} parent=5 // pred_check_branch
        %151 = sbr.rel (%p148) target = $region12
      $region11: #{_lambda_.17} parent=5 // pred_region
        %s152 = ssub.s32 %s9, 1
        // Predicated region
        $region13: #{_lambda_.17} parent=11 // pred_check
          %p153 = pneg %p56
        $region14: #{_lambda_.17} parent=11 // pred_check_branch
          %155 = sbr.rel (%p153) target = $region16
        $region15: #{_lambda_.17} parent=11 // pred_region
          %s156 = smul.u32 2, %s19
          %p157 = scmp.lt.s32.totalorder %s156, 1
          %s158 = scalar_select %p157, %s156, 1
          %p159 = scmp.lt.s32.totalorder %s21, 0
          %s160 = scalar_select %p159, %s21, 0
          %s161 = sadd.s32 %s160, %s158
          %s162 = smul.addr %s161, 4
          %s163 = scalar_lea.vmem %s0, %s162
          %s164 = smul.u32 2, %s19
        $region16: #{_lambda_.17} parent=11 // pred_fallthru
          _
      $region12: #{_lambda_.17} parent=5 // pred_fallthru
        _
      %p165 = scmp.lt.s32.totalorder %s9, 3
      // Predicated region
      $region17: #{_lambda_.17} parent=5 // pred_check
        %p166 = pneg %p165
      $region18: #{_lambda_.17} parent=5 // pred_check_branch
        %168 = sbr.rel (%p166) target = $region20
      $region19: #{_lambda_.17} parent=5 // pred_region
        // Predicated region
        $region21: #{_lambda_.17} parent=19 // pred_check
          %p169 = pneg %p78
        $region22: #{_lambda_.17} parent=19 // pred_check_branch
          %171 = sbr.rel (%p169) target = $region24
        $region23: #{_lambda_.17} parent=19 // pred_region
          %s172 = sand.u32 %s68, 1
          %s173 = sand.u32 %s68, 1
          %s174 = smul.addr %s173, 64
          %s175 = scalar_lea.vmem [#allocation3], %s174
          %s176 = smul.u32 16, %s18
          %s177 = smul.addr %s176, 3
          %s178 = sadd.s32 %s17, %s177
          %s179 = smul.addr %s178, 4
          %s180 = scalar_lea.vmem %s1, %s179
          // Predicated region
          $region25: #{_lambda_.17} parent=23 // pred_check
            _
          $region26: #{_lambda_.17} parent=23 // pred_check_branch
            %182 = sbr.rel (0) target = $region28
          $region27: #{_lambda_.17} parent=23 // pred_region
            // Predicated region
            $region29: #{_lambda_.17} parent=27 // pred_check
              _
            $region30: #{_lambda_.17} parent=27 // pred_check_branch
              %184 = sbr.rel target = $region32
            $region31: #{_lambda_.17} parent=27 // pred_region
              // Predicated region
              $region44: #{_lambda_.17} parent=31 // pred_check
                _
              $region45: #{_lambda_.17} parent=31 // pred_check_branch
                %230 = sbr.rel (0) target = $region47
              $region46: #{_lambda_.17} parent=31 // pred_region
                loop: start=0, step=1, limit=1
                $region48: #{_lambda_.17} parent=46 // loop_pre_header
                  _
                $region49: #{_lambda_.17} parent=46 // loop_header
                  %s232 = sphi 0, %s236
                  %p233 = scmp.ge.s32.totalorder %s232, 1
                  %s237 = sphi %s180, %s180
                  %s238 = sphi %s175, %s175
                $region50: #{_lambda_.17} parent=46 // loop_header_branch
                  %235 = sbr.rel (%p233) target = $region54
                $region51: #{_lambda_.17} parent=46 // loop_body
                  _
                $region52: #{_lambda_.17} parent=46 // loop_footer
                  %s236 = sadd.s32 1, %s232
                $region53: #{_lambda_.17} parent=46 // loop_footer_branch
                  %231 = sbr.rel target = $region49
                $region54: #{_lambda_.17} parent=46 // loop_exit
                  _
                %s240 = ssub.s32 16, 1
                loop: start=0, step=1, limit=1
                $region55: #{_lambda_.17} parent=46 // loop_pre_header
                  _
                $region56: #{_lambda_.17} parent=46 // loop_header
                  %s242 = sphi 0, %s246
                  %p243 = scmp.ge.s32.totalorder %s242, 1
                  %s247 = sphi %s180, %s180
                  %s248 = sphi %s175, %s175
                $region57: #{_lambda_.17} parent=46 // loop_header_branch
                  %245 = sbr.rel (%p243) target = $region61
                $region58: #{_lambda_.17} parent=46 // loop_body
                  %v249 = vld [vmem:[%s247] sm:%s240]
                  %250 = vst [vmem:[%s248] sm:%s240] %v249
                  %v251 = vld [vmem:[%s247 + $0xc] sm:%s240]
                  %252 = vst [vmem:[%s248 + $0x4] sm:%s240] %v251
                  %v253 = vld [vmem:[%s247 + $0x18] sm:%s240]
                  %254 = vst [vmem:[%s248 + $0x8] sm:%s240] %v253
                  %v255 = vld [vmem:[%s247 + $0x24] sm:%s240]
                  %256 = vst [vmem:[%s248 + $0xc] sm:%s240] %v255
                  %v257 = vld [vmem:[%s247 + $0x30] sm:%s240]
                  %258 = vst [vmem:[%s248 + $0x10] sm:%s240] %v257
                  %v259 = vld [vmem:[%s247 + $0x3c] sm:%s240]
                  %260 = vst [vmem:[%s248 + $0x14] sm:%s240] %v259
                  %v261 = vld [vmem:[%s247 + $0x48] sm:%s240]
                  %262 = vst [vmem:[%s248 + $0x18] sm:%s240] %v261
                  %v263 = vld [vmem:[%s247 + $0x54] sm:%s240]
                  %264 = vst [vmem:[%s248 + $0x1c] sm:%s240] %v263
                  %v265 = vld [vmem:[%s247 + $0x60] sm:%s240]
                  %266 = vst [vmem:[%s248 + $0x20] sm:%s240] %v265
                  %v267 = vld [vmem:[%s247 + $0x6c] sm:%s240]
                  %268 = vst [vmem:[%s248 + $0x24] sm:%s240] %v267
                  %v269 = vld [vmem:[%s247 + $0x78] sm:%s240]
                  %270 = vst [vmem:[%s248 + $0x28] sm:%s240] %v269
                  %v271 = vld [vmem:[%s247 + $0x84] sm:%s240]
                  %272 = vst [vmem:[%s248 + $0x2c] sm:%s240] %v271
                  %v273 = vld [vmem:[%s247 + $0x90] sm:%s240]
                  %274 = vst [vmem:[%s248 + $0x30] sm:%s240] %v273
                  %v275 = vld [vmem:[%s247 + $0x9c] sm:%s240]
                  %276 = vst [vmem:[%s248 + $0x34] sm:%s240] %v275
                  %v277 = vld [vmem:[%s247 + $0xa8] sm:%s240]
                  %278 = vst [vmem:[%s248 + $0x38] sm:%s240] %v277
                  %v279 = vld [vmem:[%s247 + $0xb4] sm:%s240]
                  %280 = vst [vmem:[%s248 + $0x3c] sm:%s240] %v279
                $region59: #{_lambda_.17} parent=46 // loop_footer
                  %s246 = sadd.s32 1, %s242
                $region60: #{_lambda_.17} parent=46 // loop_footer_branch
                  %241 = sbr.rel target = $region56
                $region61: #{_lambda_.17} parent=46 // loop_exit
                  _
              $region47: #{_lambda_.17} parent=31 // pred_fallthru
                _
            $region32: #{_lambda_.17} parent=27 // pred_fallthru
              _
            // Predicated region
            $region33: #{_lambda_.17} parent=27 // pred_check
              _
            $region34: #{_lambda_.17} parent=27 // pred_check_branch
              %186 = sbr.rel (0) target = $region36
            $region35: #{_lambda_.17} parent=27 // pred_region
              %s188 = ssub.s32 16, 1
              loop: start=0, step=1, limit=1
              $region37: #{_lambda_.17} parent=35 // loop_pre_header
                _
              $region38: #{_lambda_.17} parent=35 // loop_header
                %s190 = sphi 0, %s194
                %p191 = scmp.ge.s32.totalorder %s190, 1
                %s195 = sphi %s180, %s180
                %s196 = sphi %s175, %s175
              $region39: #{_lambda_.17} parent=35 // loop_header_branch
                %193 = sbr.rel (%p191) target = $region43
              $region40: #{_lambda_.17} parent=35 // loop_body
                %v197 = vld [vmem:[%s195] sm:%s188]
                %198 = vst [vmem:[%s196] sm:%s188] %v197
                %v199 = vld [vmem:[%s195 + $0xc] sm:%s188]
                %200 = vst [vmem:[%s196 + $0x4] sm:%s188] %v199
                %v201 = vld [vmem:[%s195 + $0x18] sm:%s188]
                %202 = vst [vmem:[%s196 + $0x8] sm:%s188] %v201
                %v203 = vld [vmem:[%s195 + $0x24] sm:%s188]
                %204 = vst [vmem:[%s196 + $0xc] sm:%s188] %v203
                %v205 = vld [vmem:[%s195 + $0x30] sm:%s188]
                %206 = vst [vmem:[%s196 + $0x10] sm:%s188] %v205
                %v207 = vld [vmem:[%s195 + $0x3c] sm:%s188]
                %208 = vst [vmem:[%s196 + $0x14] sm:%s188] %v207
                %v209 = vld [vmem:[%s195 + $0x48] sm:%s188]
                %210 = vst [vmem:[%s196 + $0x18] sm:%s188] %v209
                %v211 = vld [vmem:[%s195 + $0x54] sm:%s188]
                %212 = vst [vmem:[%s196 + $0x1c] sm:%s188] %v211
                %v213 = vld [vmem:[%s195 + $0x60] sm:%s188]
                %214 = vst [vmem:[%s196 + $0x20] sm:%s188] %v213
                %v215 = vld [vmem:[%s195 + $0x6c] sm:%s188]
                %216 = vst [vmem:[%s196 + $0x24] sm:%s188] %v215
                %v217 = vld [vmem:[%s195 + $0x78] sm:%s188]
                %218 = vst [vmem:[%s196 + $0x28] sm:%s188] %v217
                %v219 = vld [vmem:[%s195 + $0x84] sm:%s188]
                %220 = vst [vmem:[%s196 + $0x2c] sm:%s188] %v219
                %v221 = vld [vmem:[%s195 + $0x90] sm:%s188]
                %222 = vst [vmem:[%s196 + $0x30] sm:%s188] %v221
                %v223 = vld [vmem:[%s195 + $0x9c] sm:%s188]
                %224 = vst [vmem:[%s196 + $0x34] sm:%s188] %v223
                %v225 = vld [vmem:[%s195 + $0xa8] sm:%s188]
                %226 = vst [vmem:[%s196 + $0x38] sm:%s188] %v225
                %v227 = vld [vmem:[%s195 + $0xb4] sm:%s188]
                %228 = vst [vmem:[%s196 + $0x3c] sm:%s188] %v227
              $region41: #{_lambda_.17} parent=35 // loop_footer
                %s194 = sadd.s32 1, %s190
              $region42: #{_lambda_.17} parent=35 // loop_footer_branch
                %189 = sbr.rel target = $region38
              $region43: #{_lambda_.17} parent=35 // loop_exit
                _
            $region36: #{_lambda_.17} parent=27 // pred_fallthru
              _
          $region28: #{_lambda_.17} parent=23 // pred_fallthru
            _
          %281 = vnop
        $region24: #{_lambda_.17} parent=19 // pred_fallthru
          _
        // Predicated region
        $region62: #{_lambda_.17} parent=19 // pred_check
          %p282 = pneg %p104
        $region63: #{_lambda_.17} parent=19 // pred_check_branch
          %284 = sbr.rel (%p282) target = $region65
        $region64: #{_lambda_.17} parent=19 // pred_region
          %p285 = scmp.lt.s32.totalorder %s17, 2
          %s286 = scalar_select %p285, %s17, 2
          %s287 = scalar_lea.vmem %s2, %s286
        $region65: #{_lambda_.17} parent=19 // pred_fallthru
          _
      $region20: #{_lambda_.17} parent=5 // pred_fallthru
        _
      %p288 = scmp.le.s32.totalorder 1, %s9
      %p289 = scmp.lt.s32.totalorder %s9, 4
      %p290 = pnand %p288, %p289
      %p291 = pneg %p290
      // Predicated region
      $region66: #{_lambda_.17} parent=5 // pred_check
        _
      $region67: #{_lambda_.17} parent=5 // pred_check_branch
        %293 = sbr.rel (%p290) target = $region69
      $region68: #{_lambda_.17} parent=5 // pred_region
        %s294 = ssub.s32 %s9, 1
        %s295 = sand.u32 %s71, 1
        %s296 = sand.u32 %s71, 1
        %s297 = smul.addr %s296, 64
        %s298 = scalar_lea.vmem [#allocation3], %s297
        // Predicated region
        $region70: #{_lambda_.17} parent=68 // pred_check
          %p299 = pneg %p84
        $region71: #{_lambda_.17} parent=68 // pred_check_branch
          %301 = sbr.rel (%p299) target = $region73
        $region72: #{_lambda_.17} parent=68 // pred_region
          _
        $region73: #{_lambda_.17} parent=68 // pred_fallthru
          _
        %s302 = smul.u32 2, %s19
        %p303 = scmp.lt.s32.totalorder %s302, 1
        %s304 = scalar_select %p303, %s302, 1
        %p305 = scmp.lt.s32.totalorder %s21, 0
        %s306 = scalar_select %p305, %s21, 0
        %s307 = sadd.s32 %s306, %s304
        %s308 = smul.addr %s307, 4
        %s309 = scalar_lea.vmem %s0, %s308
        %p310 = pneg %p56
        %p311 = pneg %p53
        %s312 = sand.u32 %s71, 1
        %s313 = sand.u32 %s71, 1
        %s314 = smul.addr %s313, 64
        %s315 = scalar_lea.vmem [#allocation3], %s314
        %p316 = pneg %p84
        %p317 = pneg %p81
        %p318 = scmp.lt.s32.totalorder %s20, 2
        %s319 = scalar_select %p318, %s20, 2
        %s320 = scalar_lea.vmem %s2, %s319
        %p321 = pneg %p110
        %p322 = pneg %p107
        %p323 = pneg %p138
        %p324 = pneg %p135
        %s325 = sand.u32 %s125, 1
        %s326 = sand.u32 %s125, 1
        %s327 = smul.addr %s326, 8
        %s328 = scalar_lea.vmem [#allocation4], %s327
        %s329 = smul.u32 2, %s19
        %p330 = scmp.lt.s32.totalorder %s329, 1
        %s331 = scalar_select %p330, %s329, 1
        %p332 = scmp.lt.s32.totalorder %s21, 0
        %s333 = scalar_select %p332, %s21, 0
        %s334 = sadd.s32 %s333, %s331
        %s335 = smul.addr %s334, 4
        %s336 = scalar_lea.vmem %s0, %s335
        %s337 = smul.u32 2, %s19
        %s338 = smul.u32 16, %s21
        %p339 = scmp.lt.s32.totalorder %s20, 2
        %s340 = scalar_select %p339, %s20, 2
        %s341 = scalar_lea.vmem %s2, %s340
        %s342 = smul.u32 2, %s19
        %p343 = scmp.eq.s32.totalorder %s21, 0
        // Predicated region
        $region74: #{_lambda_.17} parent=68 // pred_check
          %p344 = pneg %p343
        $region75: #{_lambda_.17} parent=68 // pred_check_branch
          %346 = sbr.rel (%p344) target = $region77
        $region76: #{_lambda_.17} parent=68 // pred_region
          %347 = vst [vmem:[#allocation2] sm:$0xff] 0.0
          %348 = vst [vmem:[#allocation2 + $0x8] sm:$0xff] 0.0
        $region77: #{_lambda_.17} parent=68 // pred_fallthru
          _
        %v349 = vld [vmem:[#allocation2] sm:$0xff]
        %v350 = vld [vmem:[#allocation2 + $0x8] sm:$0xff]
        %v351 = vld [vmem:[%s336] sm:$0xf]
        %v352 = vld [vmem:[%s336 + $0x4] sm:$0xf]
        %v353 = vld [vmem:[%s298] sm:$0xf]
        %v354 = vld [vmem:[%s298 + $0x4] sm:$0xf]
        %v355 = vld [vmem:[%s298 + $0x8] sm:$0xf]
        %v356 = vld [vmem:[%s298 + $0xc] sm:$0xf]
        %v357 = vld [vmem:[%s298 + $0x10] sm:$0xf]
        %v358 = vld [vmem:[%s298 + $0x14] sm:$0xf]
        %v359 = vld [vmem:[%s298 + $0x18] sm:$0xf]
        %v360 = vld [vmem:[%s298 + $0x1c] sm:$0xf]
        %v361 = vld [vmem:[%s298 + $0x20] sm:$0xf]
        %v362 = vld [vmem:[%s298 + $0x24] sm:$0xf]
        %v363 = vld [vmem:[%s298 + $0x28] sm:$0xf]
        %v364 = vld [vmem:[%s298 + $0x2c] sm:$0xf]
        %v365 = vld [vmem:[%s298 + $0x30] sm:$0xf]
        %v366 = vld [vmem:[%s298 + $0x34] sm:$0xf]
        %v367 = vld [vmem:[%s298 + $0x38] sm:$0xf]
        %v368 = vld [vmem:[%s298 + $0x3c] sm:$0xf]
        %v371 = vunpack.c.l.b16 %v351
        %v372 = vunpack.c.l.b16 %v352
        %v373 = vpack.c.b16 %v372, %v371
        %v391 = vunpack.c.l.b16 %v353
        %v392 = vunpack.c.l.b16 %v354
        %v393 = vunpack.c.l.b16 %v355
        %v394 = vunpack.c.l.b16 %v356
        %v395 = vunpack.c.l.b16 %v357
        %v396 = vunpack.c.l.b16 %v358
        %v397 = vunpack.c.l.b16 %v359
        %v398 = vunpack.c.l.b16 %v360
        %v399 = vunpack.c.l.b16 %v361
        %v400 = vunpack.c.l.b16 %v362
        %v401 = vunpack.c.l.b16 %v363
        %v402 = vunpack.c.l.b16 %v364
        %v403 = vunpack.c.l.b16 %v365
        %v404 = vunpack.c.l.b16 %v366
        %v405 = vunpack.c.l.b16 %v367
        %v406 = vunpack.c.l.b16 %v368
        %v407 = vpack.c.b16 %v392, %v391
        %v408 = vpack.c.b16 %v394, %v393
        %v409 = vpack.c.b16 %v396, %v395
        %v410 = vpack.c.b16 %v398, %v397
        %v411 = vpack.c.b16 %v400, %v399
        %v412 = vpack.c.b16 %v402, %v401
        %v413 = vpack.c.b16 %v404, %v403
        %v414 = vpack.c.b16 %v406, %v405
        %423 = vmatpush.bf16.msra.mxu0 %v414
        %424 = vmatpush.bf16.msra.mxu0 %v413
        %425 = vmatpush.bf16.msra.mxu0 %v412
        %426 = vmatpush.bf16.msra.mxu0 %v411
        %427 = vmatpush.bf16.msra.mxu0 %v410
        %428 = vmatpush.bf16.msra.mxu0 %v409
        %429 = vmatpush.bf16.msra.mxu0 %v408
        %430 = vmatpush.bf16.msra.mxu0 %v407
        %431 = vmatmul.bf16.gmra.mxu0 %v373
        %v432 = vpop.f32.mrf.mxu0
        %v433 = vadd.f32 0.0, %v432
        %v434 = vpop.f32.mrf.mxu0
        %v435 = vadd.f32 0.0, %v434
        %436 = vdwg.mxu0
        %v437 = vadd.f32 %v349, %v433
        %v438 = vadd.f32 %v350, %v435
        %439 = vst [vmem:[#allocation2] sm:$0xff] %v437
        %440 = vst [vmem:[#allocation2 + $0x8] sm:$0xff] %v438
        // Predicated region
        $region78: #{_lambda_.17} parent=68 // pred_check
          %p441 = pneg %p343
        $region79: #{_lambda_.17} parent=68 // pred_check_branch
          %443 = sbr.rel (%p441) target = $region81
        $region80: #{_lambda_.17} parent=68 // pred_region
          %v444 = vld [vmem:[#allocation2] sm:$0xff]
          %v445 = vld [vmem:[#allocation2 + $0x8] sm:$0xff]
          %v446 = vld [vmem:[%s341] sm:$0x1]
          %v448 = vperm.slane %v446, 0
          %v450 = vadd.f32 %v444, %v448
          %v451 = vadd.f32 %v445, %v448
          %v452 = vpack.c.bf16 %v450, %v450
          %v453 = vpack.c.bf16 %v451, %v451
          %454 = vst [vmem:[%s328] sm:$0xf] %v452
          %455 = vst [vmem:[%s328 + $0x4] sm:$0xf] %v453
        $region81: #{_lambda_.17} parent=68 // pred_fallthru
          _
        %s456 = sand.u32 %s125, 1
        %s457 = sand.u32 %s125, 1
        %s458 = smul.addr %s457, 8
        %s459 = scalar_lea.vmem [#allocation4], %s458
        // Predicated region
        $region82: #{_lambda_.17} parent=68 // pred_check
          %p460 = pneg %p135
        $region83: #{_lambda_.17} parent=68 // pred_check_branch
          %462 = sbr.rel (%p460) target = $region85
        $region84: #{_lambda_.17} parent=68 // pred_region
          %s463 = smul.u32 2, %s19
          %s464 = smul.addr %s463, 3
          %s465 = sadd.s32 %s20, %s464
          %s466 = smul.addr %s465, 4
          %s467 = scalar_lea.vmem %s3, %s466
          // Predicated region
          $region86: #{_lambda_.17} parent=84 // pred_check
            _
          $region87: #{_lambda_.17} parent=84 // pred_check_branch
            %469 = sbr.rel (0) target = $region89
          $region88: #{_lambda_.17} parent=84 // pred_region
            // Predicated region
            $region90: #{_lambda_.17} parent=88 // pred_check
              _
            $region91: #{_lambda_.17} parent=88 // pred_check_branch
              %471 = sbr.rel target = $region93
            $region92: #{_lambda_.17} parent=88 // pred_region
              // Predicated region
              $region105: #{_lambda_.17} parent=92 // pred_check
                _
              $region106: #{_lambda_.17} parent=92 // pred_check_branch
                %489 = sbr.rel (0) target = $region108
              $region107: #{_lambda_.17} parent=92 // pred_region
                loop: start=0, step=1, limit=1
                $region109: #{_lambda_.17} parent=107 // loop_pre_header
                  _
                $region110: #{_lambda_.17} parent=107 // loop_header
                  %s491 = sphi 0, %s495
                  %p492 = scmp.ge.s32.totalorder %s491, 1
                  %s496 = sphi %s459, %s459
                  %s497 = sphi %s467, %s467
                $region111: #{_lambda_.17} parent=107 // loop_header_branch
                  %494 = sbr.rel (%p492) target = $region115
                $region112: #{_lambda_.17} parent=107 // loop_body
                  _
                $region113: #{_lambda_.17} parent=107 // loop_footer
                  %s495 = sadd.s32 1, %s491
                $region114: #{_lambda_.17} parent=107 // loop_footer_branch
                  %490 = sbr.rel target = $region110
                $region115: #{_lambda_.17} parent=107 // loop_exit
                  _
                %s499 = ssub.s32 16, 1
                loop: start=0, step=1, limit=1
                $region116: #{_lambda_.17} parent=107 // loop_pre_header
                  _
                $region117: #{_lambda_.17} parent=107 // loop_header
                  %s501 = sphi 0, %s505
                  %p502 = scmp.ge.s32.totalorder %s501, 1
                  %s506 = sphi %s459, %s459
                  %s507 = sphi %s467, %s467
                $region118: #{_lambda_.17} parent=107 // loop_header_branch
                  %504 = sbr.rel (%p502) target = $region122
                $region119: #{_lambda_.17} parent=107 // loop_body
                  %v508 = vld [vmem:[%s506] sm:%s499]
                  %509 = vst [vmem:[%s507] sm:%s499] %v508
                  %v510 = vld [vmem:[%s506 + $0x4] sm:%s499]
                  %511 = vst [vmem:[%s507 + $0xc] sm:%s499] %v510
                $region120: #{_lambda_.17} parent=107 // loop_footer
                  %s505 = sadd.s32 1, %s501
                $region121: #{_lambda_.17} parent=107 // loop_footer_branch
                  %500 = sbr.rel target = $region117
                $region122: #{_lambda_.17} parent=107 // loop_exit
                  _
              $region108: #{_lambda_.17} parent=92 // pred_fallthru
                _
            $region93: #{_lambda_.17} parent=88 // pred_fallthru
              _
            // Predicated region
            $region94: #{_lambda_.17} parent=88 // pred_check
              _
            $region95: #{_lambda_.17} parent=88 // pred_check_branch
              %473 = sbr.rel (0) target = $region97
            $region96: #{_lambda_.17} parent=88 // pred_region
              %s475 = ssub.s32 16, 1
              loop: start=0, step=1, limit=1
              $region98: #{_lambda_.17} parent=96 // loop_pre_header
                _
              $region99: #{_lambda_.17} parent=96 // loop_header
                %s477 = sphi 0, %s481
                %p478 = scmp.ge.s32.totalorder %s477, 1
                %s482 = sphi %s459, %s459
                %s483 = sphi %s467, %s467
              $region100: #{_lambda_.17} parent=96 // loop_header_branch
                %480 = sbr.rel (%p478) target = $region104
              $region101: #{_lambda_.17} parent=96 // loop_body
                %v484 = vld [vmem:[%s482] sm:%s475]
                %485 = vst [vmem:[%s483] sm:%s475] %v484
                %v486 = vld [vmem:[%s482 + $0x4] sm:%s475]
                %487 = vst [vmem:[%s483 + $0xc] sm:%s475] %v486
              $region102: #{_lambda_.17} parent=96 // loop_footer
                %s481 = sadd.s32 1, %s477
              $region103: #{_lambda_.17} parent=96 // loop_footer_branch
                %476 = sbr.rel target = $region99
              $region104: #{_lambda_.17} parent=96 // loop_exit
                _
            $region97: #{_lambda_.17} parent=88 // pred_fallthru
              _
          $region89: #{_lambda_.17} parent=84 // pred_fallthru
            _
          %512 = vnop
        $region85: #{_lambda_.17} parent=68 // pred_fallthru
          _
      $region69: #{_lambda_.17} parent=5 // pred_fallthru
        _
      %p513 = scmp.le.s32.totalorder 2, %s9
      // Predicated region
      $region123: #{_lambda_.17} parent=5 // pred_check
        %p514 = pneg %p513
      $region124: #{_lambda_.17} parent=5 // pred_check_branch
        %516 = sbr.rel (%p514) target = $region126
      $region125: #{_lambda_.17} parent=5 // pred_region
        %s517 = ssub.s32 %s9, 2
        // Predicated region
        $region127: #{_lambda_.17} parent=125 // pred_check
          %p518 = pneg %p141
        $region128: #{_lambda_.17} parent=125 // pred_check_branch
          %520 = sbr.rel (%p518) target = $region130
        $region129: #{_lambda_.17} parent=125 // pred_region
          %s521 = sand.u32 %s126, 1
          %s522 = sand.u32 %s126, 1
          %s523 = smul.addr %s522, 8
          %s524 = scalar_lea.vmem [#allocation4], %s523
        $region130: #{_lambda_.17} parent=125 // pred_fallthru
          _
      $region126: #{_lambda_.17} parent=5 // pred_fallthru
        _
    $region6: #{_lambda_.17} parent=1 // loop_footer
      %s13 = sadd.s32 1, %s9
    $region7: #{_lambda_.17} parent=1 // loop_footer_branch
      %8 = sbr.rel target = $region3
    $region8: #{_lambda_.17} parent=1 // loop_exit
      _

// kernel: _lambda_.18
$region0: #{_lambda_.18}
  #allocation0 [shape = 'u32[]', space=smem, size = 0x4, offset = 0x4, fixed_abs, tag = 'smem constant byte address 0x4 - core index']
  #allocation1 [shape = 'u32[72,128]{1,0:T(1,128)}', space=vmem, size = 0x9000, scoped, tag = 'internal scratch']
  %s0 = inlined_call_operand.vmem [shape: bf16[2,8,384], index: 0, kind: input, shape index: {}]
  %s1 = inlined_call_operand.vmem [shape: f32[2,1,8], index: 1, kind: input, shape index: {}]
  %s2 = inlined_call_operand.vmem [shape: bf16[2,8,128], index: 2, kind: output, shape index: {}]
  %s3 = sld [smem:[#allocation0]]
  $region41: #{_lambda_.18} parent=0
    _
  %s5 = ssub.s32 1, %s3
  %s6 = scalar_select 0, %s5, %s3
  loop: start=0, step=1, limit=4
  $region2: #{_lambda_.18} parent=0 // loop_pre_header
    _
  $region3: #{_lambda_.18} parent=0 // loop_header
    %s8 = sphi 0, %s12
    %p9 = scmp.ge.s32.totalorder %s8, 4
    %s18 = sphi 0, %s20
    %s21 = sphi 0, %s18
    %s22 = sphi 0, %s21
    %s38 = sphi 0, %s22
    %s44 = sphi 0, %s46
    %s47 = sphi 0, %s44
    %s48 = sphi 0, %s47
    %s64 = sphi 0, %s48
    %s70 = sphi 0, %s72
    %s73 = sphi 0, %s70
    %s74 = sphi 0, %s73
    %s90 = sphi 0, %s74
  $region4: #{_lambda_.18} parent=0 // loop_header_branch
    %11 = sbr.rel (%p9) target = $region8
  $region5: #{_lambda_.18} parent=0 // loop_body
    %s13 = ssub.s32 %s8, 1
    %s14 = ssub.s32 %s8, 2
    %s15 = sadd.s32 %s8, 1
    %s16 = ssub.s32 %s8, %s15
    %p17 = scmp.eq.s32.totalorder %s16, 0
    %s19 = sadd.s32 %s18, 1
    %s20 = scalar_select %p17, %s18, %s19
    %p23 = pneg %p17
    %p24 = scmp.eq.s32.totalorder %s8, 1
    %p25 = por %p23, %p24
    %p26 = scmp.ne.s32.totalorder %s18, %s21
    %p27 = scmp.eq.s32.totalorder %s8, 0
    %p28 = por %p26, %p27
    %p29 = scmp.ne.s32.totalorder %s18, %s21
    %p30 = scmp.eq.s32.totalorder %s13, 1
    %p31 = por %p29, %p30
    %p32 = scmp.ne.s32.totalorder %s21, %s22
    %p33 = scmp.eq.s32.totalorder %s13, 0
    %p34 = por %p32, %p33
    %p35 = scmp.ne.s32.totalorder %s21, %s22
    %p36 = scmp.eq.s32.totalorder %s14, 1
    %p37 = por %p35, %p36
    %p39 = scmp.ne.s32.totalorder %s22, %s38
    %p40 = scmp.eq.s32.totalorder %s14, 0
    %p41 = por %p39, %p40
    %s42 = ssub.s32 %s8, %s15
    %p43 = scmp.eq.s32.totalorder %s42, 0
    %s45 = sadd.s32 %s44, 1
    %s46 = scalar_select %p43, %s44, %s45
    %p49 = pneg %p43
    %p50 = scmp.eq.s32.totalorder %s8, 1
    %p51 = por %p49, %p50
    %p52 = scmp.ne.s32.totalorder %s44, %s47
    %p53 = scmp.eq.s32.totalorder %s8, 0
    %p54 = por %p52, %p53
    %p55 = scmp.ne.s32.totalorder %s44, %s47
    %p56 = scmp.eq.s32.totalorder %s13, 1
    %p57 = por %p55, %p56
    %p58 = scmp.ne.s32.totalorder %s47, %s48
    %p59 = scmp.eq.s32.totalorder %s13, 0
    %p60 = por %p58, %p59
    %p61 = scmp.ne.s32.totalorder %s47, %s48
    %p62 = scmp.eq.s32.totalorder %s14, 1
    %p63 = por %p61, %p62
    %p65 = scmp.ne.s32.totalorder %s48, %s64
    %p66 = scmp.eq.s32.totalorder %s14, 0
    %p67 = por %p65, %p66
    %s68 = ssub.s32 %s8, %s15
    %p69 = scmp.eq.s32.totalorder %s68, 0
    %s71 = sadd.s32 %s70, 1
    %s72 = scalar_select %p69, %s70, %s71
    %p75 = pneg %p69
    %p76 = scmp.eq.s32.totalorder %s8, 1
    %p77 = por %p75, %p76
    %p78 = scmp.ne.s32.totalorder %s70, %s73
    %p79 = scmp.eq.s32.totalorder %s8, 0
    %p80 = por %p78, %p79
    %p81 = scmp.ne.s32.totalorder %s70, %s73
    %p82 = scmp.eq.s32.totalorder %s13, 1
    %p83 = por %p81, %p82
    %p84 = scmp.ne.s32.totalorder %s73, %s74
    %p85 = scmp.eq.s32.totalorder %s13, 0
    %p86 = por %p84, %p85
    %p87 = scmp.ne.s32.totalorder %s73, %s74
    %p88 = scmp.eq.s32.totalorder %s14, 1
    %p89 = por %p87, %p88
    %p91 = scmp.ne.s32.totalorder %s74, %s90
    %p92 = scmp.eq.s32.totalorder %s14, 0
    %p93 = por %p91, %p92
    %p94 = scmp.le.s32.totalorder 1, %s8
    %p95 = scmp.lt.s32.totalorder %s8, 3
    %p96 = pnand %p94, %p95
    %p97 = pneg %p96
    // Predicated region
    $region9: #{_lambda_.18} parent=5 // pred_check
      _
    $region10: #{_lambda_.18} parent=5 // pred_check_branch
      %99 = sbr.rel (%p96) target = $region12
    $region11: #{_lambda_.18} parent=5 // pred_region
      %s100 = ssub.s32 %s8, 1
    $region12: #{_lambda_.18} parent=5 // pred_fallthru
      _
    %p101 = scmp.lt.s32.totalorder %s8, 2
    // Predicated region
    $region13: #{_lambda_.18} parent=5 // pred_check
      %p102 = pneg %p101
    $region14: #{_lambda_.18} parent=5 // pred_check_branch
      %104 = sbr.rel (%p102) target = $region16
    $region15: #{_lambda_.18} parent=5 // pred_region
      // Predicated region
      $region17: #{_lambda_.18} parent=15 // pred_check
        %p105 = pneg %p28
      $region18: #{_lambda_.18} parent=15 // pred_check_branch
        %107 = sbr.rel (%p105) target = $region20
      $region19: #{_lambda_.18} parent=15 // pred_region
        %p108 = scmp.lt.s32.totalorder %s8, 1
        %s109 = scalar_select %p108, %s8, 1
        %s110 = smul.addr %s109, 3
        %s111 = smul.addr %s110, 4
        %s112 = scalar_lea.vmem %s0, %s111
      $region20: #{_lambda_.18} parent=15 // pred_fallthru
        _
      // Predicated region
      $region21: #{_lambda_.18} parent=15 // pred_check
        %p113 = pneg %p54
      $region22: #{_lambda_.18} parent=15 // pred_check_branch
        %115 = sbr.rel (%p113) target = $region24
      $region23: #{_lambda_.18} parent=15 // pred_region
        %p116 = scmp.lt.s32.totalorder %s8, 1
        %s117 = scalar_select %p116, %s8, 1
        %s118 = scalar_lea.vmem %s1, %s117
      $region24: #{_lambda_.18} parent=15 // pred_fallthru
        _
    $region16: #{_lambda_.18} parent=5 // pred_fallthru
      _
    %p119 = scmp.le.s32.totalorder 1, %s8
    %p120 = scmp.lt.s32.totalorder %s8, 3
    %p121 = pnand %p119, %p120
    %p122 = pneg %p121
    // Predicated region
    $region25: #{_lambda_.18} parent=5 // pred_check
      _
    $region26: #{_lambda_.18} parent=5 // pred_check_branch
      %124 = sbr.rel (%p121) target = $region28
    $region27: #{_lambda_.18} parent=5 // pred_region
      %s125 = ssub.s32 %s8, 1
      %p126 = scmp.lt.s32.totalorder %s13, 1
      %s127 = scalar_select %p126, %s13, 1
      %s128 = smul.addr %s127, 3
      %s129 = smul.addr %s128, 4
      %s130 = scalar_lea.vmem %s0, %s129
      %p131 = pneg %p34
      %p132 = pneg %p31
      %p133 = scmp.lt.s32.totalorder %s13, 1
      %s134 = scalar_select %p133, %s13, 1
      %s135 = scalar_lea.vmem %s1, %s134
      %p136 = pneg %p60
      %p137 = pneg %p57
      %p138 = pneg %p86
      %p139 = pneg %p83
      %p140 = scmp.lt.s32.totalorder %s13, 1
      %s141 = scalar_select %p140, %s13, 1
      %s142 = smul.addr %s141, 4
      %s143 = scalar_lea.vmem %s2, %s142
      %p144 = scmp.lt.s32.totalorder %s13, 1
      %s145 = scalar_select %p144, %s13, 1
      %s146 = smul.addr %s145, 3
      %s147 = smul.addr %s146, 4
      %s148 = scalar_lea.vmem %s0, %s147
      %p149 = scmp.lt.s32.totalorder %s13, 1
      %s150 = scalar_select %p149, %s13, 1
      %s151 = scalar_lea.vmem %s1, %s150
      %p152 = scmp.lt.s32.totalorder %s13, 1
      %s153 = scalar_select %p152, %s13, 1
      %s154 = smul.addr %s153, 4
      %s155 = scalar_lea.vmem %s2, %s154
      %v157 = vld [vmem:[%s148] sm:$0xff]
      %v158 = vld [vmem:[%s148 + $0x8] sm:$0xf]
      %v159 = vld [vmem:[%s151] sm:$0x1]
      %v160 = vunpack.c.l.bf16 %v157
      %v161 = vmul.f32 %v160, 0.125
      %v162 = vpack.c.bf16 %v161, %v161
      %v164 = vperm.slane %v159, 0
      %v167 = vunpack.c.h.b16 %v157
      %v168 = vpack.c.b16 %v167, %v167
      %vm169 = vcmask 523264
      %v171 = vsel %vm169, %v162, 0
      %v174 = vsel %vm169, %v168, 0
      %176 = vmatpush.bf16.xpose.msra.mxu0 0
      %177 = vmatpush.bf16.xpose.msra.mxu0 0
      %178 = vmatpush.bf16.xpose.msra.mxu0 0
      %179 = vmatpush.bf16.xpose.msra.mxu0 0
      %180 = vmatpush.bf16.xpose.msra.mxu0 0
      %181 = vmatpush.bf16.xpose.msra.mxu0 0
      %182 = vmatpush.bf16.xpose.msra.mxu0 0
      %183 = vmatpush.bf16.xpose.msra.mxu0 %v174
      %184 = vmatmul.bf16.gmra.mxu0 %v171
      %v185 = vpop.f32.mrf.mxu0
      %v186 = vadd.f32 %v164, %v185
      %v187 = vpop.f32.mrf.mxu0
      %188 = vdwg.mxu0
      %vm189 = vcmask 64512
      %v190 = vsel %vm189, %v186, -inf
      %191 = vmax.xlane.f32.xlu0 %v190
      %v192 = vpop.xlane.xlu0 %191
      %v193 = vsub.f32 %v186, %v192
      %v194 = vmul.f32 %v193, 1.442695
      %v195 = vpow.pop %v194
      %v196 = vsel %vm189, %v195, 0.0
      %197 = vadd.xlane.f32.xlu0 %v196
      %v198 = vpop.xlane.xlu0 %197
      %v199 = vrcp.pop %v198
      %v200 = vmul.f32 %v195, %v199
      %v201 = vpack.c.bf16 %v200, %v200
      %v203 = vsel %vm189, %v201, 0
      %vm205 = vcmask 1043456
      %v207 = vsel %vm205, %v158, 0
      %209 = vmatpush.bf16.msra.mxu0 0
      %210 = vmatpush.bf16.msra.mxu0 0
      %211 = vmatpush.bf16.msra.mxu0 0
      %212 = vmatpush.bf16.msra.mxu0 0
      %213 = vmatpush.bf16.msra.mxu0 0
      %214 = vmatpush.bf16.msra.mxu0 0
      %215 = vmatpush.bf16.msra.mxu0 0
      %216 = vmatpush.bf16.msra.mxu0 %v207
      %217 = vmatmul.bf16.gmra.mxu0 %v203
      %v218 = vpop.f32.mrf.mxu0
      %v219 = vadd.f32 0.0, %v218
      %v220 = vpop.f32.mrf.mxu0
      %221 = vdwg.mxu0
      %v222 = vpack.c.bf16 %v219, %v219
      %vm223 = vcmask 519168
      %224 = vst.msk [vmem:[%s155] sm:$0xf] %vm223, %v222
      %226 = vrot.lane.b32.xlu0 %v162, 64
      %v227 = vpop.permute.xlu0 %226
      %228 = vrot.lane.b32.xlu0 %v168, 64
      %v229 = vpop.permute.xlu0 %228
      %v231 = vsel %vm169, %v227, 0
      %v234 = vsel %vm169, %v229, 0
      %236 = vmatpush.bf16.xpose.msra.mxu0 0
      %237 = vmatpush.bf16.xpose.msra.mxu0 0
      %238 = vmatpush.bf16.xpose.msra.mxu0 0
      %239 = vmatpush.bf16.xpose.msra.mxu0 0
      %240 = vmatpush.bf16.xpose.msra.mxu0 0
      %241 = vmatpush.bf16.xpose.msra.mxu0 0
      %242 = vmatpush.bf16.xpose.msra.mxu0 0
      %243 = vmatpush.bf16.xpose.msra.mxu0 %v234
      %244 = vmatmul.bf16.gmra.mxu0 %v231
      %v245 = vpop.f32.mrf.mxu0
      %v246 = vadd.f32 %v164, %v245
      %v247 = vpop.f32.mrf.mxu0
      %248 = vdwg.mxu0
      %v249 = vsel %vm189, %v246, -inf
      %250 = vmax.xlane.f32.xlu0 %v249
      %v251 = vpop.xlane.xlu0 %250
      %v252 = vsub.f32 %v246, %v251
      %v253 = vmul.f32 %v252, 1.442695
      %v254 = vpow.pop %v253
      %v255 = vsel %vm189, %v254, 0.0
      %256 = vadd.xlane.f32.xlu0 %v255
      %v257 = vpop.xlane.xlu0 %256
      %v258 = vrcp.pop %v257
      %v259 = vmul.f32 %v254, %v258
      %v260 = vpack.c.bf16 %v259, %v259
      %v262 = vunpack.c.l.b16 %v158
      %v263 = vpack.c.b16 %v262, %v262
      %264 = vrot.lane.b32.xlu0 %v263, 64
      %v265 = vpop.permute.xlu0 %264
      %v267 = vsel %vm189, %v260, 0
      %v270 = vsel %vm205, %v265, 0
      %272 = vmatpush.bf16.msra.mxu0 0
      %273 = vmatpush.bf16.msra.mxu0 0
      %274 = vmatpush.bf16.msra.mxu0 0
      %275 = vmatpush.bf16.msra.mxu0 0
      %276 = vmatpush.bf16.msra.mxu0 0
      %277 = vmatpush.bf16.msra.mxu0 0
      %278 = vmatpush.bf16.msra.mxu0 0
      %279 = vmatpush.bf16.msra.mxu0 %v270
      %280 = vmatmul.bf16.gmra.mxu0 %v267
      %v281 = vpop.f32.mrf.mxu0
      %v282 = vadd.f32 0.0, %v281
      %v283 = vpop.f32.mrf.mxu0
      %284 = vdwg.mxu0
      %v285 = vpack.c.bf16 %v282, %v282
      %287 = vrot.lane.b32.xlu0 %v285, 64
      %v288 = vpop.permute.xlu0 %287
      %vm290 = vcmask 1043968
      %291 = vst.msk [vmem:[%s155] sm:$0xf] %vm290, %v288
      %p292 = scmp.lt.s32.totalorder %s13, 1
      %s293 = scalar_select %p292, %s13, 1
      %s294 = smul.addr %s293, 4
      %s295 = scalar_lea.vmem %s2, %s294
      // Predicated region
      $region29: #{_lambda_.18} parent=27 // pred_check
        %p296 = pneg %p83
      $region30: #{_lambda_.18} parent=27 // pred_check_branch
        %298 = sbr.rel (%p296) target = $region32
      $region31: #{_lambda_.18} parent=27 // pred_region
        _
      $region32: #{_lambda_.18} parent=27 // pred_fallthru
        _
    $region28: #{_lambda_.18} parent=5 // pred_fallthru
      _
    %p299 = scmp.le.s32.totalorder 2, %s8
    // Predicated region
    $region33: #{_lambda_.18} parent=5 // pred_check
      %p300 = pneg %p299
    $region34: #{_lambda_.18} parent=5 // pred_check_branch
      %302 = sbr.rel (%p300) target = $region36
    $region35: #{_lambda_.18} parent=5 // pred_region
      %s303 = ssub.s32 %s8, 2
      // Predicated region
      $region37: #{_lambda_.18} parent=35 // pred_check
        %p304 = pneg %p89
      $region38: #{_lambda_.18} parent=35 // pred_check_branch
        %306 = sbr.rel (%p304) target = $region40
      $region39: #{_lambda_.18} parent=35 // pred_region
        %p307 = scmp.lt.s32.totalorder %s14, 1
        %s308 = scalar_select %p307, %s14, 1
        %s309 = smul.addr %s308, 4
        %s310 = scalar_lea.vmem %s2, %s309
      $region40: #{_lambda_.18} parent=35 // pred_fallthru
        _
    $region36: #{_lambda_.18} parent=5 // pred_fallthru
      _
  $region6: #{_lambda_.18} parent=0 // loop_footer
    %s12 = sadd.s32 1, %s8
  $region7: #{_lambda_.18} parent=0 // loop_footer_branch
    %7 = sbr.rel target = $region3
  $region8: #{_lambda_.18} parent=0 // loop_exit
    _

// kernel: _lambda_.20
$region0: #{_lambda_.20}
  #allocation0 [shape = 'u32[]', space=smem, size = 0x4, offset = 0x4, fixed_abs, tag = 'smem constant byte address 0x4 - core index']
  #allocation1 [shape = 'u32[72,128]{1,0:T(1,128)}', space=vmem, size = 0x9000, scoped, tag = 'internal scratch']
  %s0 = inlined_call_operand.vmem [shape: bf16[16,128], index: 0, kind: input, shape index: {}]
  %s1 = inlined_call_operand.vmem [shape: bf16[16,128], index: 1, kind: input, shape index: {}]
  %s2 = inlined_call_operand.vmem [shape: f32[1,128], index: 2, kind: input, shape index: {}]
  %s3 = inlined_call_operand.vmem [shape: f32[1,128], index: 3, kind: input, shape index: {}]
  %s4 = inlined_call_operand.vmem [shape: bf16[16,128], index: 4, kind: output, shape index: {}]
  %s5 = sld [smem:[#allocation0]]
  $region26: #{_lambda_.20} parent=0
    _
  %s7 = ssub.s32 1, %s5
  %s8 = scalar_select 0, %s7, %s5
  // Predicated region
  $region2: #{_lambda_.20} parent=0 // pred_check
    _
  $region3: #{_lambda_.20} parent=0 // pred_check_branch
    %10 = sbr.rel (0) target = $region5
  $region4: #{_lambda_.20} parent=0 // pred_region
    _
  $region5: #{_lambda_.20} parent=0 // pred_fallthru
    _
  // Predicated region
  $region6: #{_lambda_.20} parent=0 // pred_check
    _
  $region7: #{_lambda_.20} parent=0 // pred_check_branch
    %12 = sbr.rel (0) target = $region9
  $region8: #{_lambda_.20} parent=0 // pred_region
    _
  $region9: #{_lambda_.20} parent=0 // pred_fallthru
    _
  // Predicated region
  $region10: #{_lambda_.20} parent=0 // pred_check
    _
  $region11: #{_lambda_.20} parent=0 // pred_check_branch
    %14 = sbr.rel (0) target = $region13
  $region12: #{_lambda_.20} parent=0 // pred_region
    _
  $region13: #{_lambda_.20} parent=0 // pred_fallthru
    _
  // Predicated region
  $region14: #{_lambda_.20} parent=0 // pred_check
    _
  $region15: #{_lambda_.20} parent=0 // pred_check_branch
    %16 = sbr.rel (0) target = $region17
  $region16: #{_lambda_.20} parent=0 // pred_region
    _
  $region17: #{_lambda_.20} parent=0 // pred_fallthru
    _
  %v17 = vld [vmem:[%s0] sm:$0xf]
  %v18 = vld [vmem:[%s0 + $0x4] sm:$0xf]
  %v19 = vunpack.c.l.bf16 %v17
  %v20 = vunpack.c.l.bf16 %v18
  %v21 = vld [vmem:[%s1] sm:$0xf]
  %v22 = vld [vmem:[%s1 + $0x4] sm:$0xf]
  %v23 = vunpack.c.l.bf16 %v21
  %v24 = vunpack.c.l.bf16 %v22
  %v25 = vadd.f32 %v19, %v23
  %v26 = vadd.f32 %v20, %v24
  %27 = vadd.xlane.f32.xlu0 %v25
  %v28 = vpop.xlane.xlu0 %27
  %29 = vadd.xlane.f32.xlu0 %v26
  %v30 = vpop.xlane.xlu0 %29
  %v31 = vrcp.pop 128.0
  %v32 = vmul.f32 128.0, %v31
  %v33 = vsub.f32 1.0, %v32
  %v34 = vmul.f32 %v31, %v33
  %v35 = vadd.f32 %v31, %v34
  %vm36 = vweird.f32 %v31
  %v37 = vsel %vm36, %v31, %v35
  %v38 = vmul.f32 %v28, %v37
  %v39 = vmul.f32 %v30, %v37
  %v40 = vsub.f32 %v25, %v38
  %v41 = vsub.f32 %v26, %v39
  %v42 = vmul.f32 %v40, %v40
  %v43 = vmul.f32 %v41, %v41
  %44 = vadd.xlane.f32.xlu0 %v42
  %v45 = vpop.xlane.xlu0 %44
  %46 = vadd.xlane.f32.xlu0 %v43
  %v47 = vpop.xlane.xlu0 %46
  %v48 = vmul.f32 %v45, %v37
  %v49 = vmul.f32 %v47, %v37
  %v50 = vadd.f32 %v48, 1e-05
  %v51 = vadd.f32 %v49, 1e-05
  %v52 = vrsqrt.pop %v50
  %v53 = vmul.f32 %v52, %v50
  %v54 = vmul.f32 %v53, %v52
  %v55 = vmul.f32 0.5, %v54
  %v56 = vsub.f32 1.5, %v55
  %v57 = vmul.f32 %v52, %v56
  %vm58 = vweird.f32 %v50
  %vm59 = vweird.f32 %v52
  %vm60 = vmor %vm58, %vm59
  %v61 = vsel %vm60, %v52, %v57
  %v62 = vrsqrt.pop %v51
  %v63 = vmul.f32 %v62, %v51
  %v64 = vmul.f32 %v63, %v62
  %v65 = vmul.f32 0.5, %v64
  %v66 = vsub.f32 1.5, %v65
  %v67 = vmul.f32 %v62, %v66
  %vm68 = vweird.f32 %v51
  %vm69 = vweird.f32 %v62
  %vm70 = vmor %vm68, %vm69
  %v71 = vsel %vm70, %v62, %v67
  %v72 = vmul.f32 %v40, %v61
  %v73 = vmul.f32 %v41, %v71
  %v74 = vld [vmem:[%s2] sm:$0x1]
  %v76 = vperm.slane %v74, 0
  %v78 = vmul.f32 %v72, %v76
  %v79 = vmul.f32 %v73, %v76
  %v80 = vld [vmem:[%s3] sm:$0x1]
  %v82 = vperm.slane %v80, 0
  %v84 = vadd.f32 %v78, %v82
  %v85 = vadd.f32 %v79, %v82
  %v86 = vpack.c.bf16 %v84, %v84
  %v87 = vpack.c.bf16 %v85, %v85
  %88 = vst [vmem:[%s4] sm:$0xf] %v86
  %89 = vst [vmem:[%s4 + $0x4] sm:$0xf] %v87
  // Predicated region
  $region18: #{_lambda_.20} parent=0 // pred_check
    _
  $region19: #{_lambda_.20} parent=0 // pred_check_branch
    %91 = sbr.rel (0) target = $region21
  $region20: #{_lambda_.20} parent=0 // pred_region
    _
  $region21: #{_lambda_.20} parent=0 // pred_fallthru
    _
  // Predicated region
  $region22: #{_lambda_.20} parent=0 // pred_check
    _
  $region23: #{_lambda_.20} parent=0 // pred_check_branch
    %93 = sbr.rel (0) target = $region25
  $region24: #{_lambda_.20} parent=0 // pred_region
    _
  $region25: #{_lambda_.20} parent=0 // pred_fallthru
    _

// kernel: _lambda_.21
$region0: #{_lambda_.21}
  #allocation0 [shape = 'u32[]', space=smem, size = 0x4, offset = 0x4, fixed_abs, tag = 'smem constant byte address 0x4 - core index']
  #allocation1 [shape = 'u32[72,128]{1,0:T(1,128)}', space=vmem, size = 0x9000, scoped, tag = 'internal scratch']
  #allocation2 [shape = 'f32[16,256]{1,0:T(8,128)}', space=vmem, size = 0x4000, scoped, tag = 'scratch operand']
  %s0 = inlined_call_operand.vmem [shape: bf16[16,128], index: 0, kind: input, shape index: {}]
  %s1 = inlined_call_operand.vmem [shape: bf16[128,256], index: 1, kind: input, shape index: {}]
  %s2 = inlined_call_operand.vmem [shape: f32[1,256], index: 2, kind: input, shape index: {}]
  %s3 = inlined_call_operand.vmem [shape: bf16[16,256], index: 3, kind: output, shape index: {}]
  %s4 = sld [smem:[#allocation0]]
  $region30: #{_lambda_.21} parent=0
    _
  %s6 = ssub.s32 1, %s4
  %s7 = scalar_select 0, %s6, %s4
  // Predicated region
  $region2: #{_lambda_.21} parent=0 // pred_check
    _
  $region3: #{_lambda_.21} parent=0 // pred_check_branch
    %9 = sbr.rel (0) target = $region5
  $region4: #{_lambda_.21} parent=0 // pred_region
    _
  $region5: #{_lambda_.21} parent=0 // pred_fallthru
    _
  // Predicated region
  $region6: #{_lambda_.21} parent=0 // pred_check
    _
  $region7: #{_lambda_.21} parent=0 // pred_check_branch
    %11 = sbr.rel (0) target = $region9
  $region8: #{_lambda_.21} parent=0 // pred_region
    _
  $region9: #{_lambda_.21} parent=0 // pred_fallthru
    _
  // Predicated region
  $region10: #{_lambda_.21} parent=0 // pred_check
    _
  $region11: #{_lambda_.21} parent=0 // pred_check_branch
    %13 = sbr.rel (0) target = $region13
  $region12: #{_lambda_.21} parent=0 // pred_region
    _
  $region13: #{_lambda_.21} parent=0 // pred_fallthru
    _
  %p14 = scmp.eq.s32.totalorder 0, 0
  // Predicated region
  $region14: #{_lambda_.21} parent=0 // pred_check
    %p15 = pneg %p14
  $region15: #{_lambda_.21} parent=0 // pred_check_branch
    %17 = sbr.rel (%p15) target = $region17
  $region16: #{_lambda_.21} parent=0 // pred_region
    %18 = vst [vmem:[#allocation2] sm:$0xff] 0.0
    %19 = vst [vmem:[#allocation2 + $0x8] sm:$0xff] 0.0
    %20 = vst [vmem:[#allocation2 + $0x10] sm:$0xff] 0.0
    %21 = vst [vmem:[#allocation2 + $0x18] sm:$0xff] 0.0
  $region17: #{_lambda_.21} parent=0 // pred_fallthru
    _
  %v22 = vld [vmem:[#allocation2] sm:$0xff]
  %v23 = vld [vmem:[#allocation2 + $0x8] sm:$0xff]
  %v24 = vld [vmem:[#allocation2 + $0x10] sm:$0xff]
  %v25 = vld [vmem:[#allocation2 + $0x18] sm:$0xff]
  %v26 = vld [vmem:[%s0] sm:$0xf]
  %v27 = vld [vmem:[%s0 + $0x4] sm:$0xf]
  %v28 = vld [vmem:[%s1] sm:$0xff]
  %v29 = vld [vmem:[%s1 + $0x8] sm:$0xff]
  %v30 = vld [vmem:[%s1 + $0x10] sm:$0xff]
  %v31 = vld [vmem:[%s1 + $0x18] sm:$0xff]
  %v32 = vld [vmem:[%s1 + $0x20] sm:$0xff]
  %v33 = vld [vmem:[%s1 + $0x28] sm:$0xff]
  %v34 = vld [vmem:[%s1 + $0x30] sm:$0xff]
  %v35 = vld [vmem:[%s1 + $0x38] sm:$0xff]
  %v36 = vld [vmem:[%s1 + $0x40] sm:$0xff]
  %v37 = vld [vmem:[%s1 + $0x48] sm:$0xff]
  %v38 = vld [vmem:[%s1 + $0x50] sm:$0xff]
  %v39 = vld [vmem:[%s1 + $0x58] sm:$0xff]
  %v40 = vld [vmem:[%s1 + $0x60] sm:$0xff]
  %v41 = vld [vmem:[%s1 + $0x68] sm:$0xff]
  %v42 = vld [vmem:[%s1 + $0x70] sm:$0xff]
  %v43 = vld [vmem:[%s1 + $0x78] sm:$0xff]
  %v46 = vunpack.c.l.b16 %v26
  %v47 = vunpack.c.l.b16 %v27
  %v48 = vpack.c.b16 %v47, %v46
  %v66 = vunpack.c.l.b16 %v28
  %v67 = vunpack.c.h.b16 %v28
  %v68 = vunpack.c.l.b16 %v29
  %v69 = vunpack.c.h.b16 %v29
  %v70 = vunpack.c.l.b16 %v30
  %v71 = vunpack.c.h.b16 %v30
  %v72 = vunpack.c.l.b16 %v31
  %v73 = vunpack.c.h.b16 %v31
  %v74 = vunpack.c.l.b16 %v32
  %v75 = vunpack.c.h.b16 %v32
  %v76 = vunpack.c.l.b16 %v33
  %v77 = vunpack.c.h.b16 %v33
  %v78 = vunpack.c.l.b16 %v34
  %v79 = vunpack.c.h.b16 %v34
  %v80 = vunpack.c.l.b16 %v35
  %v81 = vunpack.c.h.b16 %v35
  %v82 = vunpack.c.l.b16 %v36
  %v83 = vunpack.c.h.b16 %v36
  %v84 = vunpack.c.l.b16 %v37
  %v85 = vunpack.c.h.b16 %v37
  %v86 = vunpack.c.l.b16 %v38
  %v87 = vunpack.c.h.b16 %v38
  %v88 = vunpack.c.l.b16 %v39
  %v89 = vunpack.c.h.b16 %v39
  %v90 = vunpack.c.l.b16 %v40
  %v91 = vunpack.c.h.b16 %v40
  %v92 = vunpack.c.l.b16 %v41
  %v93 = vunpack.c.h.b16 %v41
  %v94 = vunpack.c.l.b16 %v42
  %v95 = vunpack.c.h.b16 %v42
  %v96 = vunpack.c.l.b16 %v43
  %v97 = vunpack.c.h.b16 %v43
  %v98 = vpack.c.b16 %v68, %v66
  %v99 = vpack.c.b16 %v69, %v67
  %v100 = vpack.c.b16 %v72, %v70
  %v101 = vpack.c.b16 %v73, %v71
  %v102 = vpack.c.b16 %v76, %v74
  %v103 = vpack.c.b16 %v77, %v75
  %v104 = vpack.c.b16 %v80, %v78
  %v105 = vpack.c.b16 %v81, %v79
  %v106 = vpack.c.b16 %v84, %v82
  %v107 = vpack.c.b16 %v85, %v83
  %v108 = vpack.c.b16 %v88, %v86
  %v109 = vpack.c.b16 %v89, %v87
  %v110 = vpack.c.b16 %v92, %v90
  %v111 = vpack.c.b16 %v93, %v91
  %v112 = vpack.c.b16 %v96, %v94
  %v113 = vpack.c.b16 %v97, %v95
  %130 = vmatpush.bf16.msra.mxu0 %v112
  %131 = vmatpush.bf16.msra.mxu0 %v110
  %132 = vmatpush.bf16.msra.mxu0 %v108
  %133 = vmatpush.bf16.msra.mxu0 %v106
  %134 = vmatpush.bf16.msra.mxu0 %v104
  %135 = vmatpush.bf16.msra.mxu0 %v102
  %136 = vmatpush.bf16.msra.mxu0 %v100
  %137 = vmatpush.bf16.msra.mxu0 %v98
  %138 = vmatmul.bf16.gmra.mxu0 %v48
  %v139 = vpop.f32.mrf.mxu0
  %v140 = vadd.f32 0.0, %v139
  %v141 = vpop.f32.mrf.mxu0
  %v142 = vadd.f32 0.0, %v141
  %143 = vdwg.mxu0
  %144 = vmatpush.bf16.msra.mxu0 %v113
  %145 = vmatpush.bf16.msra.mxu0 %v111
  %146 = vmatpush.bf16.msra.mxu0 %v109
  %147 = vmatpush.bf16.msra.mxu0 %v107
  %148 = vmatpush.bf16.msra.mxu0 %v105
  %149 = vmatpush.bf16.msra.mxu0 %v103
  %150 = vmatpush.bf16.msra.mxu0 %v101
  %151 = vmatpush.bf16.msra.mxu0 %v99
  %152 = vmatmul.bf16.gmra.mxu0 %v48
  %v153 = vpop.f32.mrf.mxu0
  %v154 = vadd.f32 0.0, %v153
  %v155 = vpop.f32.mrf.mxu0
  %v156 = vadd.f32 0.0, %v155
  %157 = vdwg.mxu0
  %v158 = vadd.f32 %v22, %v140
  %v159 = vadd.f32 %v23, %v154
  %v160 = vadd.f32 %v24, %v142
  %v161 = vadd.f32 %v25, %v156
  %162 = vst [vmem:[#allocation2] sm:$0xff] %v158
  %163 = vst [vmem:[#allocation2 + $0x8] sm:$0xff] %v159
  %164 = vst [vmem:[#allocation2 + $0x10] sm:$0xff] %v160
  %165 = vst [vmem:[#allocation2 + $0x18] sm:$0xff] %v161
  // Predicated region
  $region18: #{_lambda_.21} parent=0 // pred_check
    %p166 = pneg %p14
  $region19: #{_lambda_.21} parent=0 // pred_check_branch
    %168 = sbr.rel (%p166) target = $region21
  $region20: #{_lambda_.21} parent=0 // pred_region
    %v169 = vld [vmem:[#allocation2] sm:$0xff]
    %v170 = vld [vmem:[#allocation2 + $0x8] sm:$0xff]
    %v171 = vld [vmem:[#allocation2 + $0x10] sm:$0xff]
    %v172 = vld [vmem:[#allocation2 + $0x18] sm:$0xff]
    %v173 = vld [vmem:[%s2] sm:$0x3]
    %v175 = vperm.slane %v173, 0
    %v176 = vperm.slane %v173, 1
    %v179 = vadd.f32 %v169, %v175
    %v180 = vadd.f32 %v170, %v176
    %v181 = vadd.f32 %v171, %v175
    %v182 = vadd.f32 %v172, %v176
    %v183 = vmul.f32 %v179, 0.5
    %v184 = vmul.f32 %v180, 0.5
    %v185 = vmul.f32 %v181, 0.5
    %v186 = vmul.f32 %v182, 0.5
    %v187 = vmul.f32 %v179, 0.70710677
    %v188 = vmul.f32 %v180, 0.70710677
    %v189 = vmul.f32 %v181, 0.70710677
    %v190 = vmul.f32 %v182, 0.70710677
    %v191 = vmul.f32 %v187, %v187
    %v192 = vmin.f32 16.0, %v191
    %v193 = vmul.f32 %v192, 2.1237322e-06
    %v194 = vadd.f32 %v193, 0.00028619796
    %v195 = vmul.f32 %v192, %v194
    %v196 = vadd.f32 %v195, 0.0036580483
    %v197 = vmul.f32 %v192, %v196
    %v198 = vadd.f32 %v197, 0.05243302
    %v199 = vmul.f32 %v192, %v198
    %v200 = vadd.f32 %v199, 0.18741608
    %v201 = vmul.f32 %v192, %v200
    %v202 = vadd.f32 %v201, 1.1283791
    %v203 = vmul.f32 %v187, %v202
    %v204 = vmul.f32 %v192, 3.8918573e-05
    %v205 = vadd.f32 %v204, 0.001143296
    %v206 = vmul.f32 %v192, %v205
    %v207 = vadd.f32 %v206, 0.014752088
    %v208 = vmul.f32 %v192, %v207
    %v209 = vadd.f32 %v208, 0.112945676
    %v210 = vmul.f32 %v192, %v209
    %v211 = vadd.f32 %v210, 0.4994258
    %v212 = vmul.f32 %v192, %v211
    %v213 = vadd.f32 %v212, 1.0
    %v214 = vrcp.pop %v213
    %v215 = vmul.f32 %v213, %v214
    %v216 = vsub.f32 1.0, %v215
    %v217 = vmul.f32 %v214, %v216
    %v218 = vadd.f32 %v214, %v217
    %vm219 = vweird.f32 %v213
    %vm220 = vweird.f32 %v214
    %vm221 = vmor %vm219, %vm220
    %v222 = vsel %vm221, %v214, %v218
    %v223 = vand.u32 2147483647, %v213
    %vm224 = vcmp.eq.f32.partialorder %v223, 8.507059e+37
    %v225 = vand.u32 %v213, 2147483648
    %v226 = vor.u32 1.1754944e-38, %v225
    %v227 = vsel %vm224, %v226, %v222
    %v228 = vmul.f32 %v203, %v227
    %v229 = vmin.f32 %v228, 1.0
    %v230 = vmax.f32 %v229, -1.0
    %v231 = vmul.f32 %v188, %v188
    %v232 = vmin.f32 16.0, %v231
    %v233 = vmul.f32 %v232, 2.1237322e-06
    %v234 = vadd.f32 %v233, 0.00028619796
    %v235 = vmul.f32 %v232, %v234
    %v236 = vadd.f32 %v235, 0.0036580483
    %v237 = vmul.f32 %v232, %v236
    %v238 = vadd.f32 %v237, 0.05243302
    %v239 = vmul.f32 %v232, %v238
    %v240 = vadd.f32 %v239, 0.18741608
    %v241 = vmul.f32 %v232, %v240
    %v242 = vadd.f32 %v241, 1.1283791
    %v243 = vmul.f32 %v188, %v242
    %v244 = vmul.f32 %v232, 3.8918573e-05
    %v245 = vadd.f32 %v244, 0.001143296
    %v246 = vmul.f32 %v232, %v245
    %v247 = vadd.f32 %v246, 0.014752088
    %v248 = vmul.f32 %v232, %v247
    %v249 = vadd.f32 %v248, 0.112945676
    %v250 = vmul.f32 %v232, %v249
    %v251 = vadd.f32 %v250, 0.4994258
    %v252 = vmul.f32 %v232, %v251
    %v253 = vadd.f32 %v252, 1.0
    %v254 = vrcp.pop %v253
    %v255 = vmul.f32 %v253, %v254
    %v256 = vsub.f32 1.0, %v255
    %v257 = vmul.f32 %v254, %v256
    %v258 = vadd.f32 %v254, %v257
    %vm259 = vweird.f32 %v253
    %vm260 = vweird.f32 %v254
    %vm261 = vmor %vm259, %vm260
    %v262 = vsel %vm261, %v254, %v258
    %v263 = vand.u32 2147483647, %v253
    %vm264 = vcmp.eq.f32.partialorder %v263, 8.507059e+37
    %v265 = vand.u32 %v253, 2147483648
    %v266 = vor.u32 1.1754944e-38, %v265
    %v267 = vsel %vm264, %v266, %v262
    %v268 = vmul.f32 %v243, %v267
    %v269 = vmin.f32 %v268, 1.0
    %v270 = vmax.f32 %v269, -1.0
    %v271 = vmul.f32 %v189, %v189
    %v272 = vmin.f32 16.0, %v271
    %v273 = vmul.f32 %v272, 2.1237322e-06
    %v274 = vadd.f32 %v273, 0.00028619796
    %v275 = vmul.f32 %v272, %v274
    %v276 = vadd.f32 %v275, 0.0036580483
    %v277 = vmul.f32 %v272, %v276
    %v278 = vadd.f32 %v277, 0.05243302
    %v279 = vmul.f32 %v272, %v278
    %v280 = vadd.f32 %v279, 0.18741608
    %v281 = vmul.f32 %v272, %v280
    %v282 = vadd.f32 %v281, 1.1283791
    %v283 = vmul.f32 %v189, %v282
    %v284 = vmul.f32 %v272, 3.8918573e-05
    %v285 = vadd.f32 %v284, 0.001143296
    %v286 = vmul.f32 %v272, %v285
    %v287 = vadd.f32 %v286, 0.014752088
    %v288 = vmul.f32 %v272, %v287
    %v289 = vadd.f32 %v288, 0.112945676
    %v290 = vmul.f32 %v272, %v289
    %v291 = vadd.f32 %v290, 0.4994258
    %v292 = vmul.f32 %v272, %v291
    %v293 = vadd.f32 %v292, 1.0
    %v294 = vrcp.pop %v293
    %v295 = vmul.f32 %v293, %v294
    %v296 = vsub.f32 1.0, %v295
    %v297 = vmul.f32 %v294, %v296
    %v298 = vadd.f32 %v294, %v297
    %vm299 = vweird.f32 %v293
    %vm300 = vweird.f32 %v294
    %vm301 = vmor %vm299, %vm300
    %v302 = vsel %vm301, %v294, %v298
    %v303 = vand.u32 2147483647, %v293
    %vm304 = vcmp.eq.f32.partialorder %v303, 8.507059e+37
    %v305 = vand.u32 %v293, 2147483648
    %v306 = vor.u32 1.1754944e-38, %v305
    %v307 = vsel %vm304, %v306, %v302
    %v308 = vmul.f32 %v283, %v307
    %v309 = vmin.f32 %v308, 1.0
    %v310 = vmax.f32 %v309, -1.0
    %v311 = vmul.f32 %v190, %v190
    %v312 = vmin.f32 16.0, %v311
    %v313 = vmul.f32 %v312, 2.1237322e-06
    %v314 = vadd.f32 %v313, 0.00028619796
    %v315 = vmul.f32 %v312, %v314
    %v316 = vadd.f32 %v315, 0.0036580483
    %v317 = vmul.f32 %v312, %v316
    %v318 = vadd.f32 %v317, 0.05243302
    %v319 = vmul.f32 %v312, %v318
    %v320 = vadd.f32 %v319, 0.18741608
    %v321 = vmul.f32 %v312, %v320
    %v322 = vadd.f32 %v321, 1.1283791
    %v323 = vmul.f32 %v190, %v322
    %v324 = vmul.f32 %v312, 3.8918573e-05
    %v325 = vadd.f32 %v324, 0.001143296
    %v326 = vmul.f32 %v312, %v325
    %v327 = vadd.f32 %v326, 0.014752088
    %v328 = vmul.f32 %v312, %v327
    %v329 = vadd.f32 %v328, 0.112945676
    %v330 = vmul.f32 %v312, %v329
    %v331 = vadd.f32 %v330, 0.4994258
    %v332 = vmul.f32 %v312, %v331
    %v333 = vadd.f32 %v332, 1.0
    %v334 = vrcp.pop %v333
    %v335 = vmul.f32 %v333, %v334
    %v336 = vsub.f32 1.0, %v335
    %v337 = vmul.f32 %v334, %v336
    %v338 = vadd.f32 %v334, %v337
    %vm339 = vweird.f32 %v333
    %vm340 = vweird.f32 %v334
    %vm341 = vmor %vm339, %vm340
    %v342 = vsel %vm341, %v334, %v338
    %v343 = vand.u32 2147483647, %v333
    %vm344 = vcmp.eq.f32.partialorder %v343, 8.507059e+37
    %v345 = vand.u32 %v333, 2147483648
    %v346 = vor.u32 1.1754944e-38, %v345
    %v347 = vsel %vm344, %v346, %v342
    %v348 = vmul.f32 %v323, %v347
    %v349 = vmin.f32 %v348, 1.0
    %v350 = vmax.f32 %v349, -1.0
    %v351 = vadd.f32 %v230, 1.0
    %v352 = vadd.f32 %v270, 1.0
    %v353 = vadd.f32 %v310, 1.0
    %v354 = vadd.f32 %v350, 1.0
    %v355 = vmul.f32 %v183, %v351
    %v356 = vmul.f32 %v184, %v352
    %v357 = vmul.f32 %v185, %v353
    %v358 = vmul.f32 %v186, %v354
    %v359 = vpack.c.bf16 %v356, %v355
    %v360 = vpack.c.bf16 %v358, %v357
    %361 = vst [vmem:[%s3] sm:$0xff] %v359
    %362 = vst [vmem:[%s3 + $0x8] sm:$0xff] %v360
  $region21: #{_lambda_.21} parent=0 // pred_fallthru
    _
  // Predicated region
  $region22: #{_lambda_.21} parent=0 // pred_check
    _
  $region23: #{_lambda_.21} parent=0 // pred_check_branch
    %364 = sbr.rel (0) target = $region25
  $region24: #{_lambda_.21} parent=0 // pred_region
    _
  $region25: #{_lambda_.21} parent=0 // pred_fallthru
    _
  // Predicated region
  $region26: #{_lambda_.21} parent=0 // pred_check
    _
  $region27: #{_lambda_.21} parent=0 // pred_check_branch
    %366 = sbr.rel (0) target = $region29
  $region28: #{_lambda_.21} parent=0 // pred_region
    _
  $region29: #{_lambda_.21} parent=0 // pred_fallthru
    _

// kernel: _lambda_.22
$region0: #{_lambda_.22}
  #allocation0 [shape = 'u32[]', space=smem, size = 0x4, offset = 0x4, fixed_abs, tag = 'smem constant byte address 0x4 - core index']
  #allocation1 [shape = 'u32[72,128]{1,0:T(1,128)}', space=vmem, size = 0x9000, scoped, tag = 'internal scratch']
  #allocation2 [shape = 'f32[16,128]{1,0:T(8,128)}', space=vmem, size = 0x2000, scoped, tag = 'scratch operand']
  %s0 = inlined_call_operand.vmem [shape: bf16[16,256], index: 0, kind: input, shape index: {}]
  %s1 = inlined_call_operand.vmem [shape: bf16[256,128], index: 1, kind: input, shape index: {}]
  %s2 = inlined_call_operand.vmem [shape: f32[1,128], index: 2, kind: input, shape index: {}]
  %s3 = inlined_call_operand.vmem [shape: bf16[16,128], index: 3, kind: output, shape index: {}]
  %s4 = sld [smem:[#allocation0]]
  $region30: #{_lambda_.22} parent=0
    _
  %s6 = ssub.s32 1, %s4
  %s7 = scalar_select 0, %s6, %s4
  // Predicated region
  $region2: #{_lambda_.22} parent=0 // pred_check
    _
  $region3: #{_lambda_.22} parent=0 // pred_check_branch
    %9 = sbr.rel (0) target = $region5
  $region4: #{_lambda_.22} parent=0 // pred_region
    _
  $region5: #{_lambda_.22} parent=0 // pred_fallthru
    _
  // Predicated region
  $region6: #{_lambda_.22} parent=0 // pred_check
    _
  $region7: #{_lambda_.22} parent=0 // pred_check_branch
    %11 = sbr.rel (0) target = $region9
  $region8: #{_lambda_.22} parent=0 // pred_region
    _
  $region9: #{_lambda_.22} parent=0 // pred_fallthru
    _
  // Predicated region
  $region10: #{_lambda_.22} parent=0 // pred_check
    _
  $region11: #{_lambda_.22} parent=0 // pred_check_branch
    %13 = sbr.rel (0) target = $region13
  $region12: #{_lambda_.22} parent=0 // pred_region
    _
  $region13: #{_lambda_.22} parent=0 // pred_fallthru
    _
  %p14 = scmp.eq.s32.totalorder 0, 0
  // Predicated region
  $region14: #{_lambda_.22} parent=0 // pred_check
    %p15 = pneg %p14
  $region15: #{_lambda_.22} parent=0 // pred_check_branch
    %17 = sbr.rel (%p15) target = $region17
  $region16: #{_lambda_.22} parent=0 // pred_region
    %18 = vst [vmem:[#allocation2] sm:$0xff] 0.0
    %19 = vst [vmem:[#allocation2 + $0x8] sm:$0xff] 0.0
  $region17: #{_lambda_.22} parent=0 // pred_fallthru
    _
  %v20 = vld [vmem:[#allocation2] sm:$0xff]
  %v21 = vld [vmem:[#allocation2 + $0x8] sm:$0xff]
  %v22 = vld [vmem:[%s0] sm:$0xff]
  %v23 = vld [vmem:[%s0 + $0x8] sm:$0xff]
  %v24 = vld [vmem:[%s1] sm:$0xf]
  %v25 = vld [vmem:[%s1 + $0x4] sm:$0xf]
  %v26 = vld [vmem:[%s1 + $0x8] sm:$0xf]
  %v27 = vld [vmem:[%s1 + $0xc] sm:$0xf]
  %v28 = vld [vmem:[%s1 + $0x10] sm:$0xf]
  %v29 = vld [vmem:[%s1 + $0x14] sm:$0xf]
  %v30 = vld [vmem:[%s1 + $0x18] sm:$0xf]
  %v31 = vld [vmem:[%s1 + $0x1c] sm:$0xf]
  %v32 = vld [vmem:[%s1 + $0x20] sm:$0xf]
  %v33 = vld [vmem:[%s1 + $0x24] sm:$0xf]
  %v34 = vld [vmem:[%s1 + $0x28] sm:$0xf]
  %v35 = vld [vmem:[%s1 + $0x2c] sm:$0xf]
  %v36 = vld [vmem:[%s1 + $0x30] sm:$0xf]
  %v37 = vld [vmem:[%s1 + $0x34] sm:$0xf]
  %v38 = vld [vmem:[%s1 + $0x38] sm:$0xf]
  %v39 = vld [vmem:[%s1 + $0x3c] sm:$0xf]
  %v40 = vld [vmem:[%s1 + $0x40] sm:$0xf]
  %v41 = vld [vmem:[%s1 + $0x44] sm:$0xf]
  %v42 = vld [vmem:[%s1 + $0x48] sm:$0xf]
  %v43 = vld [vmem:[%s1 + $0x4c] sm:$0xf]
  %v44 = vld [vmem:[%s1 + $0x50] sm:$0xf]
  %v45 = vld [vmem:[%s1 + $0x54] sm:$0xf]
  %v46 = vld [vmem:[%s1 + $0x58] sm:$0xf]
  %v47 = vld [vmem:[%s1 + $0x5c] sm:$0xf]
  %v48 = vld [vmem:[%s1 + $0x60] sm:$0xf]
  %v49 = vld [vmem:[%s1 + $0x64] sm:$0xf]
  %v50 = vld [vmem:[%s1 + $0x68] sm:$0xf]
  %v51 = vld [vmem:[%s1 + $0x6c] sm:$0xf]
  %v52 = vld [vmem:[%s1 + $0x70] sm:$0xf]
  %v53 = vld [vmem:[%s1 + $0x74] sm:$0xf]
  %v54 = vld [vmem:[%s1 + $0x78] sm:$0xf]
  %v55 = vld [vmem:[%s1 + $0x7c] sm:$0xf]
  %v58 = vunpack.c.l.b16 %v22
  %v59 = vunpack.c.h.b16 %v22
  %v60 = vunpack.c.l.b16 %v23
  %v61 = vunpack.c.h.b16 %v23
  %v62 = vpack.c.b16 %v60, %v58
  %v63 = vpack.c.b16 %v61, %v59
  %v98 = vunpack.c.l.b16 %v24
  %v99 = vunpack.c.l.b16 %v25
  %v100 = vunpack.c.l.b16 %v26
  %v101 = vunpack.c.l.b16 %v27
  %v102 = vunpack.c.l.b16 %v28
  %v103 = vunpack.c.l.b16 %v29
  %v104 = vunpack.c.l.b16 %v30
  %v105 = vunpack.c.l.b16 %v31
  %v106 = vunpack.c.l.b16 %v32
  %v107 = vunpack.c.l.b16 %v33
  %v108 = vunpack.c.l.b16 %v34
  %v109 = vunpack.c.l.b16 %v35
  %v110 = vunpack.c.l.b16 %v36
  %v111 = vunpack.c.l.b16 %v37
  %v112 = vunpack.c.l.b16 %v38
  %v113 = vunpack.c.l.b16 %v39
  %v114 = vunpack.c.l.b16 %v40
  %v115 = vunpack.c.l.b16 %v41
  %v116 = vunpack.c.l.b16 %v42
  %v117 = vunpack.c.l.b16 %v43
  %v118 = vunpack.c.l.b16 %v44
  %v119 = vunpack.c.l.b16 %v45
  %v120 = vunpack.c.l.b16 %v46
  %v121 = vunpack.c.l.b16 %v47
  %v122 = vunpack.c.l.b16 %v48
  %v123 = vunpack.c.l.b16 %v49
  %v124 = vunpack.c.l.b16 %v50
  %v125 = vunpack.c.l.b16 %v51
  %v126 = vunpack.c.l.b16 %v52
  %v127 = vunpack.c.l.b16 %v53
  %v128 = vunpack.c.l.b16 %v54
  %v129 = vunpack.c.l.b16 %v55
  %v130 = vpack.c.b16 %v99, %v98
  %v131 = vpack.c.b16 %v101, %v100
  %v132 = vpack.c.b16 %v103, %v102
  %v133 = vpack.c.b16 %v105, %v104
  %v134 = vpack.c.b16 %v107, %v106
  %v135 = vpack.c.b16 %v109, %v108
  %v136 = vpack.c.b16 %v111, %v110
  %v137 = vpack.c.b16 %v113, %v112
  %v138 = vpack.c.b16 %v115, %v114
  %v139 = vpack.c.b16 %v117, %v116
  %v140 = vpack.c.b16 %v119, %v118
  %v141 = vpack.c.b16 %v121, %v120
  %v142 = vpack.c.b16 %v123, %v122
  %v143 = vpack.c.b16 %v125, %v124
  %v144 = vpack.c.b16 %v127, %v126
  %v145 = vpack.c.b16 %v129, %v128
  %162 = vmatpush.bf16.msra.mxu0 %v137
  %163 = vmatpush.bf16.msra.mxu0 %v136
  %164 = vmatpush.bf16.msra.mxu0 %v135
  %165 = vmatpush.bf16.msra.mxu0 %v134
  %166 = vmatpush.bf16.msra.mxu0 %v133
  %167 = vmatpush.bf16.msra.mxu0 %v132
  %168 = vmatpush.bf16.msra.mxu0 %v131
  %169 = vmatpush.bf16.msra.mxu0 %v130
  %170 = vmatmul.bf16.gmra.mxu0 %v62
  %v171 = vpop.f32.mrf.mxu0
  %v172 = vadd.f32 0.0, %v171
  %v173 = vpop.f32.mrf.mxu0
  %v174 = vadd.f32 0.0, %v173
  %175 = vdwg.mxu0
  %176 = vmatpush.bf16.msra.mxu0 %v145
  %177 = vmatpush.bf16.msra.mxu0 %v144
  %178 = vmatpush.bf16.msra.mxu0 %v143
  %179 = vmatpush.bf16.msra.mxu0 %v142
  %180 = vmatpush.bf16.msra.mxu0 %v141
  %181 = vmatpush.bf16.msra.mxu0 %v140
  %182 = vmatpush.bf16.msra.mxu0 %v139
  %183 = vmatpush.bf16.msra.mxu0 %v138
  %184 = vmatmul.bf16.gmra.mxu0 %v63
  %v185 = vpop.f32.mrf.mxu0
  %v186 = vadd.f32 %v172, %v185
  %v187 = vpop.f32.mrf.mxu0
  %v188 = vadd.f32 %v174, %v187
  %189 = vdwg.mxu0
  %v190 = vadd.f32 %v20, %v186
  %v191 = vadd.f32 %v21, %v188
  %192 = vst [vmem:[#allocation2] sm:$0xff] %v190
  %193 = vst [vmem:[#allocation2 + $0x8] sm:$0xff] %v191
  // Predicated region
  $region18: #{_lambda_.22} parent=0 // pred_check
    %p194 = pneg %p14
  $region19: #{_lambda_.22} parent=0 // pred_check_branch
    %196 = sbr.rel (%p194) target = $region21
  $region20: #{_lambda_.22} parent=0 // pred_region
    %v197 = vld [vmem:[#allocation2] sm:$0xff]
    %v198 = vld [vmem:[#allocation2 + $0x8] sm:$0xff]
    %v199 = vld [vmem:[%s2] sm:$0x1]
    %v201 = vperm.slane %v199, 0
    %v203 = vadd.f32 %v197, %v201
    %v204 = vadd.f32 %v198, %v201
    %v205 = vpack.c.bf16 %v203, %v203
    %v206 = vpack.c.bf16 %v204, %v204
    %207 = vst [vmem:[%s3] sm:$0xf] %v205
    %208 = vst [vmem:[%s3 + $0x4] sm:$0xf] %v206
  $region21: #{_lambda_.22} parent=0 // pred_fallthru
    _
  // Predicated region
  $region22: #{_lambda_.22} parent=0 // pred_check
    _
  $region23: #{_lambda_.22} parent=0 // pred_check_branch
    %210 = sbr.rel (0) target = $region25
  $region24: #{_lambda_.22} parent=0 // pred_region
    _
  $region25: #{_lambda_.22} parent=0 // pred_fallthru
    _
  // Predicated region
  $region26: #{_lambda_.22} parent=0 // pred_check
    _
  $region27: #{_lambda_.22} parent=0 // pred_check_branch
    %212 = sbr.rel (0) target = $region29
  $region28: #{_lambda_.22} parent=0 // pred_region
    _
  $region29: #{_lambda_.22} parent=0 // pred_fallthru
    _

// kernel: _lambda_.31
$region0: #{_lambda_.31}
  #allocation0 [shape = 'u32[]', space=smem, size = 0x4, offset = 0x4, fixed_abs, tag = 'smem constant byte address 0x4 - core index']
  #allocation1 [shape = 'u32[72,128]{1,0:T(1,128)}', space=vmem, size = 0x9000, scoped, tag = 'internal scratch']
  %s0 = inlined_call_operand.vmem [shape: bf16[2,128], index: 0, kind: input, shape index: {}]
  %s1 = inlined_call_operand.vmem [shape: bf16[128,128], index: 1, kind: input, shape index: {}]
  %s2 = inlined_call_operand.vmem [shape: f32[1,128], index: 2, kind: input, shape index: {}]
  %s3 = inlined_call_operand.vmem [shape: bf16[128,128], index: 3, kind: input, shape index: {}]
  %s4 = inlined_call_operand.vmem [shape: f32[1,128], index: 4, kind: input, shape index: {}]
  %s5 = inlined_call_operand.hbm [shape: f32[2,128], index: 5, kind: output, shape index: {}]
  %s6 = sld [smem:[#allocation0]]
  $region30: #{_lambda_.31} parent=0
    _
  %s8 = ssub.s32 1, %s6
  %s9 = scalar_select 0, %s8, %s6
  $region1: #{_lambda_.31} parent=0
    #allocation2 [shape = 'u8[1024]{0}', space=vmem, size = 0x400, scoped, tag = 'output window, operand 0, single buffered']
    #allocation3 [shape = 's32[1]{0}', space=sflag, size = 0x4, scoped, tag = 'scoped memory for _lambda_.31']
    %10 = vsyncpa [#allocation3], 0
    // Predicated region
    $region2: #{_lambda_.31} parent=1 // pred_check
      _
    $region3: #{_lambda_.31} parent=1 // pred_check_branch
      %12 = sbr.rel (0) target = $region5
    $region4: #{_lambda_.31} parent=1 // pred_region
      _
    $region5: #{_lambda_.31} parent=1 // pred_fallthru
      _
    // Predicated region
    $region6: #{_lambda_.31} parent=1 // pred_check
      _
    $region7: #{_lambda_.31} parent=1 // pred_check_branch
      %14 = sbr.rel (0) target = $region9
    $region8: #{_lambda_.31} parent=1 // pred_region
      _
    $region9: #{_lambda_.31} parent=1 // pred_fallthru
      _
    // Predicated region
    $region10: #{_lambda_.31} parent=1 // pred_check
      _
    $region11: #{_lambda_.31} parent=1 // pred_check_branch
      %16 = sbr.rel (0) target = $region13
    $region12: #{_lambda_.31} parent=1 // pred_region
      _
    $region13: #{_lambda_.31} parent=1 // pred_fallthru
      _
    // Predicated region
    $region14: #{_lambda_.31} parent=1 // pred_check
      _
    $region15: #{_lambda_.31} parent=1 // pred_check_branch
      %18 = sbr.rel (0) target = $region17
    $region16: #{_lambda_.31} parent=1 // pred_region
      _
    $region17: #{_lambda_.31} parent=1 // pred_fallthru
      _
    // Predicated region
    $region18: #{_lambda_.31} parent=1 // pred_check
      _
    $region19: #{_lambda_.31} parent=1 // pred_check_branch
      %20 = sbr.rel (0) target = $region21
    $region20: #{_lambda_.31} parent=1 // pred_region
      _
    $region21: #{_lambda_.31} parent=1 // pred_fallthru
      _
    %v21 = vld [vmem:[%s0] sm:$0x1]
    %v22 = vld [vmem:[%s1] sm:$0xf]
    %v23 = vld [vmem:[%s1 + $0x4] sm:$0xf]
    %v24 = vld [vmem:[%s1 + $0x8] sm:$0xf]
    %v25 = vld [vmem:[%s1 + $0xc] sm:$0xf]
    %v26 = vld [vmem:[%s1 + $0x10] sm:$0xf]
    %v27 = vld [vmem:[%s1 + $0x14] sm:$0xf]
    %v28 = vld [vmem:[%s1 + $0x18] sm:$0xf]
    %v29 = vld [vmem:[%s1 + $0x1c] sm:$0xf]
    %v30 = vld [vmem:[%s1 + $0x20] sm:$0xf]
    %v31 = vld [vmem:[%s1 + $0x24] sm:$0xf]
    %v32 = vld [vmem:[%s1 + $0x28] sm:$0xf]
    %v33 = vld [vmem:[%s1 + $0x2c] sm:$0xf]
    %v34 = vld [vmem:[%s1 + $0x30] sm:$0xf]
    %v35 = vld [vmem:[%s1 + $0x34] sm:$0xf]
    %v36 = vld [vmem:[%s1 + $0x38] sm:$0xf]
    %v37 = vld [vmem:[%s1 + $0x3c] sm:$0xf]
    %v38 = vld [vmem:[%s2] sm:$0x1]
    %v40 = vperm.slane %v38, 0
    %v58 = vunpack.c.l.b16 %v22
    %v59 = vunpack.c.l.b16 %v23
    %v60 = vunpack.c.l.b16 %v24
    %v61 = vunpack.c.l.b16 %v25
    %v62 = vunpack.c.l.b16 %v26
    %v63 = vunpack.c.l.b16 %v27
    %v64 = vunpack.c.l.b16 %v28
    %v65 = vunpack.c.l.b16 %v29
    %v66 = vunpack.c.l.b16 %v30
    %v67 = vunpack.c.l.b16 %v31
    %v68 = vunpack.c.l.b16 %v32
    %v69 = vunpack.c.l.b16 %v33
    %v70 = vunpack.c.l.b16 %v34
    %v71 = vunpack.c.l.b16 %v35
    %v72 = vunpack.c.l.b16 %v36
    %v73 = vunpack.c.l.b16 %v37
    %v74 = vpack.c.b16 %v59, %v58
    %v75 = vpack.c.b16 %v61, %v60
    %v76 = vpack.c.b16 %v63, %v62
    %v77 = vpack.c.b16 %v65, %v64
    %v78 = vpack.c.b16 %v67, %v66
    %v79 = vpack.c.b16 %v69, %v68
    %v80 = vpack.c.b16 %v71, %v70
    %v81 = vpack.c.b16 %v73, %v72
    %90 = vmatpush.bf16.msra.mxu0 %v81
    %91 = vmatpush.bf16.msra.mxu0 %v80
    %92 = vmatpush.bf16.msra.mxu0 %v79
    %93 = vmatpush.bf16.msra.mxu0 %v78
    %94 = vmatpush.bf16.msra.mxu0 %v77
    %95 = vmatpush.bf16.msra.mxu0 %v76
    %96 = vmatpush.bf16.msra.mxu0 %v75
    %97 = vmatpush.bf16.msra.mxu0 %v74
    %98 = vmatmul.bf16.gmra.mxu0 %v21
    %v99 = vpop.f32.mrf.mxu0
    %v100 = vadd.f32 %v40, %v99
    %v101 = vpop.f32.mrf.mxu0
    %102 = vdwg.mxu0
    %v103 = vtanh.pop %v100
    %v104 = vpack.c.bf16 %v103, %v103
    %v105 = vld [vmem:[%s3] sm:$0xf]
    %v106 = vld [vmem:[%s3 + $0x4] sm:$0xf]
    %v107 = vld [vmem:[%s3 + $0x8] sm:$0xf]
    %v108 = vld [vmem:[%s3 + $0xc] sm:$0xf]
    %v109 = vld [vmem:[%s3 + $0x10] sm:$0xf]
    %v110 = vld [vmem:[%s3 + $0x14] sm:$0xf]
    %v111 = vld [vmem:[%s3 + $0x18] sm:$0xf]
    %v112 = vld [vmem:[%s3 + $0x1c] sm:$0xf]
    %v113 = vld [vmem:[%s3 + $0x20] sm:$0xf]
    %v114 = vld [vmem:[%s3 + $0x24] sm:$0xf]
    %v115 = vld [vmem:[%s3 + $0x28] sm:$0xf]
    %v116 = vld [vmem:[%s3 + $0x2c] sm:$0xf]
    %v117 = vld [vmem:[%s3 + $0x30] sm:$0xf]
    %v118 = vld [vmem:[%s3 + $0x34] sm:$0xf]
    %v119 = vld [vmem:[%s3 + $0x38] sm:$0xf]
    %v120 = vld [vmem:[%s3 + $0x3c] sm:$0xf]
    %v121 = vld [vmem:[%s4] sm:$0x1]
    %v123 = vperm.slane %v121, 0
    %v141 = vunpack.c.l.b16 %v105
    %v142 = vunpack.c.l.b16 %v106
    %v143 = vunpack.c.l.b16 %v107
    %v144 = vunpack.c.l.b16 %v108
    %v145 = vunpack.c.l.b16 %v109
    %v146 = vunpack.c.l.b16 %v110
    %v147 = vunpack.c.l.b16 %v111
    %v148 = vunpack.c.l.b16 %v112
    %v149 = vunpack.c.l.b16 %v113
    %v150 = vunpack.c.l.b16 %v114
    %v151 = vunpack.c.l.b16 %v115
    %v152 = vunpack.c.l.b16 %v116
    %v153 = vunpack.c.l.b16 %v117
    %v154 = vunpack.c.l.b16 %v118
    %v155 = vunpack.c.l.b16 %v119
    %v156 = vunpack.c.l.b16 %v120
    %v157 = vpack.c.b16 %v142, %v141
    %v158 = vpack.c.b16 %v144, %v143
    %v159 = vpack.c.b16 %v146, %v145
    %v160 = vpack.c.b16 %v148, %v147
    %v161 = vpack.c.b16 %v150, %v149
    %v162 = vpack.c.b16 %v152, %v151
    %v163 = vpack.c.b16 %v154, %v153
    %v164 = vpack.c.b16 %v156, %v155
    %173 = vmatpush.bf16.msra.mxu0 %v164
    %174 = vmatpush.bf16.msra.mxu0 %v163
    %175 = vmatpush.bf16.msra.mxu0 %v162
    %176 = vmatpush.bf16.msra.mxu0 %v161
    %177 = vmatpush.bf16.msra.mxu0 %v160
    %178 = vmatpush.bf16.msra.mxu0 %v159
    %179 = vmatpush.bf16.msra.mxu0 %v158
    %180 = vmatpush.bf16.msra.mxu0 %v157
    %181 = vmatmul.bf16.gmra.mxu0 %v104
    %v182 = vpop.f32.mrf.mxu0
    %v183 = vadd.f32 %v123, %v182
    %v184 = vpop.f32.mrf.mxu0
    %185 = vdwg.mxu0
    %186 = vst [vmem:[#allocation2] sm:$0x3] %v183
    // Predicated region
    $region22: #{_lambda_.31} parent=1 // pred_check
      _
    $region23: #{_lambda_.31} parent=1 // pred_check_branch
      %188 = sbr.rel (0) target = $region25
    $region24: #{_lambda_.31} parent=1 // pred_region
      %190 = vsyncadd [#allocation3], 0
      %s192 = sshll.u32 [#allocation2], 4
      %s193 = int_to_ptr.vmem [resolvable:$true] %s192
      %s194 = sshll.u32 %s5, 4
      %s195 = int_to_ptr.hbm [resolvable:$true] %s194
      %197 = dma.vmem_to_hbm [thread:$0]  %s193, 32, %s195, [#allocation3]
    $region25: #{_lambda_.31} parent=1 // pred_fallthru
      _
    // Predicated region
    $region26: #{_lambda_.31} parent=1 // pred_check
      _
    $region27: #{_lambda_.31} parent=1 // pred_check_branch
      %199 = sbr.rel (0) target = $region29
    $region28: #{_lambda_.31} parent=1 // pred_region
      %201 = dma.done [#allocation3], 32
    $region29: #{_lambda_.31} parent=1 // pred_fallthru
      _
    %202 = vsyncpa [#allocation3], 1

</llo_original>
